<compile_context>
chip_gen: v6e
topology: v6e:2x2x1
jax: 0.10.0
libtpu: 0.0.40
codegen_flags: <defaults>
</compile_context>

<pallas_src>
import functools
import math

import jax
import jax.numpy as jnp
from jax import lax
from jax.experimental import pallas as pl
from jax.experimental.pallas import tpu as pltpu


def _round_up(a, b):
    return -(-a // b) * b


def _default_vmem_budget():
    # Working-set budget for in-flight blocks + intermediates.  Conservative:
    # fits v5e's ~16-24 MiB scoped guidance and stays far below v7x's 64 MiB
    # physical VMEM; scales up a bit when get_tpu_info reports more capacity.
    cap = None
    try:
        cap = getattr(pltpu.get_tpu_info(), "vmem_capacity_bytes", None)
    except Exception:
        cap = None
    if cap:
        return int(max(8 << 20, min(int(cap) // 3, 40 << 20)))
    return 20 << 20


def _default_num_cores():
    # The leading "parallel" shard axis only pays off on chips with >1
    # TensorCore (v7x); default to 1 on single-TC chips (v5e / v6e).
    try:
        info = pltpu.get_tpu_info()
        for name in ("num_tensorcores", "tensorcore_count", "num_cores",
                     "cores_per_chip", "num_cores_per_chip"):
            v = getattr(info, name, None)
            if isinstance(v, int) and v >= 1:
                return max(1, min(int(v), 2))
    except Exception:
        pass
    return 1


def _pick_row_tile(n, d, k, row_tile, vmem_budget_bytes):
    if row_tile is None:
        # VMEM model per grid step: ~4 live f32 (tile, K) intermediates
        # (score / iota / onehot / select temps) + double-buffered x and q
        # blocks (2 * 2 * tile * D * 4 B) + resident w / dw / cnt.
        per_row = 4 * (4 * k + 4 * d)
        fixed = 4 * (4 * d * k + 6 * k)
        avail = max(vmem_budget_bytes - fixed, 128 * per_row)
        tile = (avail // per_row) // 128 * 128
        tile = int(min(max(tile, 256), 4096))
    else:
        if row_tile % 128 != 0:
            raise ValueError("row_tile must be a multiple of 128")
        tile = int(row_tile)
    # A tile (much) larger than the whole problem is pure padding.
    tile = min(tile, _round_up(max(n, 1), 128))
    return max(tile, 128)


# ----------------------------------------------------------------------------
# Straight-through estimator: forward value == quantized codes, gradient flows
# only to x (matches `input + (quantize - input).detach()` without paying an
# extra elementwise HBM pass in the forward).
# ----------------------------------------------------------------------------
@jax.custom_vjp
def _straight_through(x, q):
    return q


def _straight_through_fwd(x, q):
    return q, None


def _straight_through_bwd(_, g):
    return g, jnp.zeros_like(g)


_straight_through.defvjp(_straight_through_fwd, _straight_through_bwd)


# ----------------------------------------------------------------------------
# Kernel
# ----------------------------------------------------------------------------
def _vq_kernel(x_ref, w_ref, wb_ref, q_ref, idx_ref, cnt_ref, dw_ref, sse_ref,
               *, tile, tiles_per_shard, n_valid, needs_mask, score_in_bf16):
    s = pl.program_id(0)   # shard axis ("parallel"): dual-TC sharding on v7x
    t = pl.program_id(1)   # row-tile axis ("arbitrary"): carries accumulators

    x = x_ref[...]                                   # (tile, D) f32
    w = w_ref[...]                                   # (D, K)    f32
    wb = wb_ref[...]                                 # (1, K)    f32 = -0.5*||w||^2

    tn = x.shape[0]
    d = x.shape[1]
    k = w.shape[1]

    iota_k = lax.broadcasted_iota(jnp.int32, (tn, k), 1)

    if needs_mask:
        # Rows at/after n_valid are zero padding or garbage from a partial
        # trailing block: zero them so cnt / dw / sse stay exact.
        row0 = (s * tiles_per_shard + t) * tile
        valid = (lax.broadcasted_iota(jnp.int32, (tn, 1), 0) + row0) < n_valid
        x = jnp.where(valid, x, 0.0)

    # score = x @ w - 0.5 * ||w||^2 ; argmax(score) == argmin ||x - w||^2.
    # (||x||^2 is per-row constant and cannot change the argmin; ||w||^2 is
    #  grid-invariant and precomputed in the wrapper.)
    if score_in_bf16:
        score = jnp.dot(x.astype(jnp.bfloat16), w.astype(jnp.bfloat16),
                        preferred_element_type=jnp.float32) + wb
    else:
        score = jnp.dot(x, w, preferred_element_type=jnp.float32) + wb

    # argmax with first-index tie-break (matches torch (-distances).max(dim=1)).
    # NOTE: an all-NaN score row selects no code (one-hot row of zeros).
    max_val = jnp.max(score, axis=1, keepdims=True)                  # (tile, 1)
    idx2d = jnp.min(jnp.where(score >= max_val, iota_k, k),
                    axis=1, keepdims=True)                           # (tile, 1)
    onehot = (iota_k == idx2d).astype(jnp.float32)                   # (tile, K)
    if needs_mask:
        onehot = jnp.where(valid, onehot, 0.0)

    # quantize = embedding lookup == onehot @ w^T  -> (tile, D)
    quantized = lax.dot_general(onehot, w, (((1,), (1,)), ((), ())),
                                preferred_element_type=jnp.float32)
    q_ref[...] = quantized.astype(q_ref.dtype)

    # Lane-dense nearest-code indices: (1, K) code-iota @ onehot^T -> (1, tile).
    # Exact: a one-hot row has a single nonzero term; iota values <= K-1 are
    # exact in bf16 for K <= 256 (use f32 otherwise).
    idx_dt = jnp.bfloat16 if k <= 256 else jnp.float32
    code_iota = lax.broadcasted_iota(jnp.int32, (1, k), 1).astype(idx_dt)
    idx_lane = lax.dot_general(code_iota, onehot.astype(idx_dt),
                               (((1,), (1,)), ((), ())),
                               preferred_element_type=jnp.float32)   # (1, tile)
    idx_ref[...] = (idx_lane + 0.5).astype(jnp.int32)

    # Per-shard accumulators, resident across the t ("arbitrary") axis.
    @pl.when(t == 0)
    def _():
        cnt_ref[...] = jnp.zeros_like(cnt_ref)
        dw_ref[...] = jnp.zeros_like(dw_ref)
        sse_ref[...] = jnp.zeros_like(sse_ref)

    cnt_ref[...] += jnp.sum(onehot, axis=0, keepdims=True).reshape(1, 1, k)
    # dw = x^T @ onehot (contract over rows) -> (D, K)
    dw_ref[...] += lax.dot_general(x, onehot, (((0,), (0,)), ((), ())),
                                   preferred_element_type=jnp.float32).reshape(1, d, k)
    # Fused code loss (MSE numerator): masked rows contribute exactly 0.
    diff = quantized - x
    sse_ref[...] += jnp.sum(diff * diff, keepdims=True).reshape(1, 1, 1)


# ----------------------------------------------------------------------------
# Wrapper
# ----------------------------------------------------------------------------
@functools.partial(
    jax.jit,
    static_argnames=("tile", "num_shards", "tiles_per_shard", "n", "pad_rows",
                     "needs_mask", "vmem_limit_bytes", "score_in_bf16"))
def _quantize_forward_impl(x, w, *, tile, num_shards, tiles_per_shard, n,
                           pad_rows, needs_mask, vmem_limit_bytes,
                           score_in_bf16):
    d = x.shape[-1]
    k = w.shape[1]

    flat = x.reshape(-1, d).astype(jnp.float32)
    wf = w.astype(jnp.float32)
    wb = -0.5 * jnp.sum(wf * wf, axis=0, keepdims=True)     # (1, K), hoisted

    # Only the tiny n < tile case pads (a single under-sized block); otherwise
    # partial trailing blocks + in-kernel masking handle the remainder rows.
    flat_in = jnp.pad(flat, ((0, pad_rows), (0, 0))) if pad_rows else flat
    out_rows = n + pad_rows

    kernel = functools.partial(
        _vq_kernel, tile=tile, tiles_per_shard=tiles_per_shard, n_valid=n,
        needs_mask=needs_mask, score_in_bf16=score_in_bf16)

    q_rows, idx_lane, cnt_p, dw_p, sse_p = pl.pallas_call(
        kernel,
        out_shape=(
            jax.ShapeDtypeStruct((out_rows, d), x.dtype),            # quantized rows
            jax.ShapeDtypeStruct((1, out_rows), jnp.int32),          # idx, lane-dense
            jax.ShapeDtypeStruct((num_shards, 1, k), jnp.float32),   # per-shard counts
            jax.ShapeDtypeStruct((num_shards, d, k), jnp.float32),   # per-shard dw
            jax.ShapeDtypeStruct((num_shards, 1, 1), jnp.float32),   # per-shard SSE
        ),
        grid_spec=pltpu.PrefetchScalarGridSpec(
            num_scalar_prefetch=0,
            grid=(num_shards, tiles_per_shard),
            in_specs=[
                pl.BlockSpec((tile, d), lambda s, t: (s * tiles_per_shard + t, 0)),
                pl.BlockSpec((d, k), lambda s, t: (0, 0)),
                pl.BlockSpec((1, k), lambda s, t: (0, 0)),
            ],
            out_specs=[
                pl.BlockSpec((tile, d), lambda s, t: (s * tiles_per_shard + t, 0)),
                pl.BlockSpec((1, tile), lambda s, t: (0, s * tiles_per_shard + t)),
                pl.BlockSpec((1, 1, k), lambda s, t: (s, 0, 0)),
                pl.BlockSpec((1, d, k), lambda s, t: (s, 0, 0)),
                pl.BlockSpec((1, 1, 1), lambda s, t: (s, 0, 0)),
            ],
        ),
        compiler_params=pltpu.CompilerParams(
            dimension_semantics=("parallel", "arbitrary"),
            vmem_limit_bytes=vmem_limit_bytes),
    )(flat_in, wf, wb)

    q_flat = q_rows[:n] if pad_rows else q_rows
    idx_flat = idx_lane[0, :n] if pad_rows else idx_lane[0]

    quantized = q_flat.reshape(x.shape)
    indices = idx_flat.reshape(x.shape[:-1])
    counts = jnp.sum(cnt_p, axis=0)                          # (1, K)
    dw = jnp.sum(dw_p, axis=0)                               # (D, K)

    # code_loss resolved via loss_str2func() in the reference; MSE ('l2') used.
    # TODO(synk): plumb the configured code_loss if it is not MSE.
    loss = jnp.sum(sse_p) / (n * d)

    # Straight-through estimator: forward value == quantized, grad -> x.
    quantize_st = _straight_through(x, lax.stop_gradient(quantized))

    avg_probs = counts[0] / n
    perplexity = jnp.exp(-jnp.sum(avg_probs * jnp.log(avg_probs + 1e-10)))

    return {
        "loss": loss,
        "quantize": quantize_st,
        "dema_cluster_size": counts.reshape(1, k),
        "dw": dw.reshape(1, d, k),
        "encoding_1nn_indices": indices,
        "perplexity": perplexity,
    }


def quantize_forward(x, w, *, row_tile=None, num_cores=None,
                     vmem_budget_bytes=None, score_in_bf16=False):
    """Reproduces Quantize.forward(input, weights_loss=None).

    x: (..., D) input, w: (D, K) codebook (`_w` buffer).
    row_tile: rows per grid step (multiple of 128); None -> VMEM-budgeted.
    num_cores: shard count for the leading "parallel" grid axis (None -> 2 on
    dual-TensorCore chips when detectable, else 1).
    score_in_bf16: optional bf16 distance matmul (may flip near-tie indices).
    """
    d = int(x.shape[-1])
    k = int(w.shape[1])
    n = int(math.prod(x.shape[:-1])) if x.ndim > 1 else 1

    if vmem_budget_bytes is None:
        vmem_budget_bytes = _default_vmem_budget()
    tile = _pick_row_tile(n, d, k, row_tile, vmem_budget_bytes)

    num_tiles = -(-n // tile)
    nc = num_cores if num_cores is not None else _default_num_cores()
    if nc > 1 and num_tiles % nc == 0 and num_tiles >= 2 * nc:
        num_shards = nc
    else:
        num_shards = 1
    tiles_per_shard = num_tiles // num_shards

    covered = num_tiles * tile
    pad_rows = covered - n if n < tile else 0    # pad only the tiny single-block case
    needs_mask = covered != n

    # Raise the scoped-VMEM limit only when the estimated working set needs it;
    # cap at 48 MiB so it is safe on every generation (v7x physical = 64 MiB).
    est_bytes = 4 * tile * (4 * k + 4 * d) + 4 * (4 * d * k + 6 * k) + 8 * tile
    vmem_limit_bytes = None
    if est_bytes > (12 << 20):
        vmem_limit_bytes = int(min(max(2 * est_bytes, 32 << 20), 48 << 20))

    return _quantize_forward_impl(
        x, w, tile=tile, num_shards=num_shards, tiles_per_shard=tiles_per_shard,
        n=n, pad_rows=pad_rows, needs_mask=needs_mask,
        vmem_limit_bytes=vmem_limit_bytes, score_in_bf16=bool(score_in_bf16))


# ----------------------------------------------------------------------------
# Pure-JAX reference matching the PyTorch forward (for self-checking).
# ----------------------------------------------------------------------------
def _reference_forward(x, w):
    d = x.shape[-1]
    k = w.shape[1]
    flat = x.reshape(-1, d)
    n = flat.shape[0]
    dist = (jnp.sum(flat**2, axis=1, keepdims=True)
            - 2.0 * flat @ w
            + jnp.sum(w**2, axis=0, keepdims=True))
    idx = jnp.argmin(dist, axis=1)
    onehot = jax.nn.one_hot(idx, k, dtype=flat.dtype)
    q = onehot @ w.T
    avg = jnp.sum(onehot, axis=0) / n
    return {
        "quantize": x + jax.lax.stop_gradient(q.reshape(x.shape) - x),
        "encoding_1nn_indices": idx.reshape(x.shape[:-1]),
        "dema_cluster_size": jnp.sum(onehot, axis=0)[None, :],
        "dw": (flat.T @ onehot)[None],
        "loss": jnp.mean((q - flat) ** 2),
        "perplexity": jnp.exp(-jnp.sum(avg * jnp.log(avg + 1e-10))),
    }


if __name__ == "__main__":
    embedding_dim = 32     # D
    num_embeddings = 128   # K

    key = jax.random.PRNGKey(0)
    k_w, k_x1, k_x2, k_x3 = jax.random.split(key, 4)
    # _w = torch.randn(embedding_dim, num_embeddings) -> deterministic init here
    w = jax.random.normal(k_w, (embedding_dim, num_embeddings), dtype=jnp.float32)

    # case 1: tiny input (batch=2, seq=8, D) -> single under-sized block (padded)
    x1 = jax.random.normal(k_x1, (2, 8, embedding_dim), dtype=jnp.float32)
    # case 2: (4, 160, D), row_tile=256 -> 3 tiles, partial trailing block, no pad
    x2 = jax.random.normal(k_x2, (4, 160, embedding_dim), dtype=jnp.float32)
    # case 3: (5, 200, D), row_tile=128, num_cores=2 -> 2-shard "parallel" axis,
    #         multi-tile accumulation + partial trailing block
    x3 = jax.random.normal(k_x3, (5, 200, embedding_dim), dtype=jnp.float32)

    cases = [
        (x1, dict()),
        (x2, dict(row_tile=256)),
        (x3, dict(row_tile=128, num_cores=2)),
    ]

    for x, kwargs in cases:
        out = quantize_forward(x, w, **kwargs)
        jax.block_until_ready(out)

        ref = _reference_forward(x, w)
        assert out["encoding_1nn_indices"].shape == x.shape[:-1]
        assert jnp.array_equal(out["encoding_1nn_indices"],
                               ref["encoding_1nn_indices"])
        assert jnp.allclose(out["quantize"], ref["quantize"], atol=1e-4)
        assert jnp.allclose(out["dema_cluster_size"], ref["dema_cluster_size"],
                            atol=1e-4)
        assert jnp.allclose(out["dw"], ref["dw"], atol=1e-3)
        assert jnp.allclose(out["loss"], ref["loss"], rtol=2e-4, atol=1e-4)
        assert jnp.allclose(out["perplexity"], ref["perplexity"], atol=1e-3)

    print("KERNEL_OK")
</pallas_src>

<mosaic_0001>
module attributes {stable_mosaic.version = 11 : i64} {
  func.func @_vq_kernel(%arg0: i32, %arg1: i32, %arg2: memref<128x32xf32, #tpu.memory_space<vmem>>, %arg3: memref<32x128xf32, #tpu.memory_space<vmem>>, %arg4: memref<1x128xf32, #tpu.memory_space<vmem>>, %arg5: memref<128x32xf32, #tpu.memory_space<vmem>>, %arg6: memref<1x128xi32, #tpu.memory_space<vmem>>, %arg7: memref<1x1x128xf32, #tpu.memory_space<vmem>>, %arg8: memref<1x32x128xf32, #tpu.memory_space<vmem>>, %arg9: memref<1x1x1xf32, #tpu.memory_space<vmem>>) attributes {dimension_semantics = [#tpu.dimension_semantics<parallel>, #tpu.dimension_semantics<arbitrary>], iteration_bounds = array<i64: 1, 1>, scalar_prefetch = 0 : i64, scratch_operands = 0 : i64, tpu.core_type = #tpu.core_type<tc>, window_params = [{transform_indices = @transform_0, window_bounds = array<i64: 128, 32>}, {pipeline_mode = #tpu.pipeline_mode<synchronous>, transform_indices = @transform_1, window_bounds = array<i64: 32, 128>}, {pipeline_mode = #tpu.pipeline_mode<synchronous>, transform_indices = @transform_2, window_bounds = array<i64: 1, 128>}, {transform_indices = @transform_3, window_bounds = array<i64: 128, 32>}, {transform_indices = @transform_4, window_bounds = array<i64: 1, 128>}, {transform_indices = @transform_5, window_bounds = array<i64: 1, 1, 128>}, {transform_indices = @transform_6, window_bounds = array<i64: 1, 32, 128>}, {transform_indices = @transform_7, window_bounds = array<i64: 1, 1, 1>}]} {
    %c0 = arith.constant 0 : index
    %c0_0 = arith.constant 0 : index
    %0 = vector.load %arg2[%c0, %c0_0] : memref<128x32xf32, #tpu.memory_space<vmem>>, vector<128x32xf32>
    %c0_1 = arith.constant 0 : index
    %c0_2 = arith.constant 0 : index
    %1 = vector.load %arg3[%c0_1, %c0_2] : memref<32x128xf32, #tpu.memory_space<vmem>>, vector<32x128xf32>
    %c0_3 = arith.constant 0 : index
    %c0_4 = arith.constant 0 : index
    %2 = vector.load %arg4[%c0_3, %c0_4] : memref<1x128xf32, #tpu.memory_space<vmem>>, vector<1x128xf32>
    %3 = tpu.iota {dimensions = array<i32: 1>} : vector<128x128xi32>
    %c1_i32 = arith.constant 1 : i32
    %4 = arith.muli %arg0, %c1_i32 : i32
    %5 = arith.addi %4, %arg1 : i32
    %c128_i32 = arith.constant 128 : i32
    %6 = arith.muli %5, %c128_i32 : i32
    %7 = tpu.iota {dimensions = array<i32: 0>} : vector<128x1xi32>
    %8 = vector.broadcast %6 : i32 to vector<128x1xi32>
    %9 = arith.addi %7, %8 : vector<128x1xi32>
    %c16_i32 = arith.constant 16 : i32
    %10 = vector.broadcast %c16_i32 : i32 to vector<128x1xi32>
    %11 = arith.cmpi slt, %9, %10 : vector<128x1xi32>
    %cst = arith.constant 0.000000e+00 : f32
    %12 = vector.shape_cast %11 : vector<128x1xi1> to vector<128x1xi1>
    %13 = vector.broadcast %12 : vector<128x1xi1> to vector<128x32xi1>
    %14 = vector.broadcast %cst : f32 to vector<128x32xf32>
    %15 = arith.select %13, %0, %14 : vector<128x32xi1>, vector<128x32xf32>
    %cst_5 = arith.constant dense<0.000000e+00> : vector<128x128xf32>
    %16 = tpu.matmul %15, %1, %cst_5 {dimension_numbers = #tpu.dot_dimension_numbers<[1], [0], [0], [1], [0, 0, 1, 1], [], []>} : vector<128x32xf32>, vector<32x128xf32>, vector<128x128xf32> -> vector<128x128xf32>
    %17 = vector.broadcast %2 : vector<1x128xf32> to vector<128x128xf32>
    %18 = arith.addf %16, %17 : vector<128x128xf32>
    %cst_6 = arith.constant dense<0xFF800000> : vector<128xf32>
    %19 = vector.multi_reduction <maximumf>, %18, %cst_6 [1] : vector<128x128xf32> to vector<128xf32>
    %20 = vector.shape_cast %19 : vector<128xf32> to vector<128x1xf32>
    %21 = vector.broadcast %20 : vector<128x1xf32> to vector<128x128xf32>
    %22 = arith.cmpf oge, %18, %21 : vector<128x128xf32>
    %c128_i32_7 = arith.constant 128 : i32
    %23 = vector.broadcast %c128_i32_7 : i32 to vector<128x128xi32>
    %24 = arith.select %22, %3, %23 : vector<128x128xi1>, vector<128x128xi32>
    %cst_8 = arith.constant dense<2147483647> : vector<128xi32>
    %25 = vector.multi_reduction <minsi>, %24, %cst_8 [1] : vector<128x128xi32> to vector<128xi32>
    %26 = vector.shape_cast %25 : vector<128xi32> to vector<128x1xi32>
    %27 = vector.broadcast %26 : vector<128x1xi32> to vector<128x128xi32>
    %28 = arith.cmpi eq, %3, %27 : vector<128x128xi32>
    %29 = arith.extui %28 : vector<128x128xi1> to vector<128x128xi32>
    %30 = arith.sitofp %29 : vector<128x128xi32> to vector<128x128xf32>
    %cst_9 = arith.constant 0.000000e+00 : f32
    %31 = vector.shape_cast %11 : vector<128x1xi1> to vector<128x1xi1>
    %32 = vector.broadcast %31 : vector<128x1xi1> to vector<128x128xi1>
    %33 = vector.broadcast %cst_9 : f32 to vector<128x128xf32>
    %34 = arith.select %32, %30, %33 : vector<128x128xi1>, vector<128x128xf32>
    %cst_10 = arith.constant dense<0.000000e+00> : vector<128x32xf32>
    %35 = tpu.matmul %34, %1, %cst_10 {dimension_numbers = #tpu.dot_dimension_numbers<[1], [1], [0], [0], [0, 0, 1, 0], [], []>} : vector<128x128xf32>, vector<32x128xf32>, vector<128x32xf32> -> vector<128x32xf32>
    %c0_11 = arith.constant 0 : index
    %c0_12 = arith.constant 0 : index
    %36 = vector.load %arg5[%c0_11, %c0_12] : memref<128x32xf32, #tpu.memory_space<vmem>>, vector<128x32xf32>
    tpu.vector_store %arg5[%c0_11, %c0_12], %35 {strides = array<i32>} : memref<128x32xf32, #tpu.memory_space<vmem>>, vector<128x32xf32>,
    %37 = tpu.iota {dimensions = array<i32: 1>} : vector<1x128xi32>
    %38 = arith.sitofp %37 : vector<1x128xi32> to vector<1x128xbf16>
    %39 = arith.truncf %34 : vector<128x128xf32> to vector<128x128xbf16>
    %cst_13 = arith.constant dense<0.000000e+00> : vector<1x128xf32>
    %40 = tpu.matmul %38, %39, %cst_13 {dimension_numbers = #tpu.dot_dimension_numbers<[1], [1], [0], [0], [0, 0, 1, 0], [], []>} : vector<1x128xbf16>, vector<128x128xbf16>, vector<1x128xf32> -> vector<1x128xf32>
    %cst_14 = arith.constant 5.000000e-01 : f32
    %41 = vector.broadcast %cst_14 : f32 to vector<1x128xf32>
    %42 = arith.addf %40, %41 : vector<1x128xf32>
    %43 = arith.fptosi %42 : vector<1x128xf32> to vector<1x128xi32>
    %c0_15 = arith.constant 0 : index
    %c0_16 = arith.constant 0 : index
    %44 = vector.load %arg6[%c0_15, %c0_16] : memref<1x128xi32, #tpu.memory_space<vmem>>, vector<1x128xi32>
    tpu.vector_store %arg6[%c0_15, %c0_16], %43 {strides = array<i32>} : memref<1x128xi32, #tpu.memory_space<vmem>>, vector<1x128xi32>,
    %c0_i32 = arith.constant 0 : i32
    %45 = arith.cmpi eq, %arg1, %c0_i32 : i32
    %46 = arith.extui %45 : i1 to i32
    %c0_i32_17 = arith.constant 0 : i32
    %47 = arith.cmpi ne, %46, %c0_i32_17 : i32
    scf.if %47 {
      %cst_39 = arith.constant 0.000000e+00 : f32
      %70 = vector.broadcast %cst_39 : f32 to vector<1x1x128xf32>
      %c0_40 = arith.constant 0 : index
      %c0_41 = arith.constant 0 : index
      %c0_42 = arith.constant 0 : index
      %71 = vector.load %arg7[%c0_40, %c0_41, %c0_42] : memref<1x1x128xf32, #tpu.memory_space<vmem>>, vector<1x1x128xf32>
      tpu.vector_store %arg7[%c0_40, %c0_41, %c0_42], %70 {strides = array<i32>} : memref<1x1x128xf32, #tpu.memory_space<vmem>>, vector<1x1x128xf32>,
      %cst_43 = arith.constant 0.000000e+00 : f32
      %72 = vector.broadcast %cst_43 : f32 to vector<1x32x128xf32>
      %c0_44 = arith.constant 0 : index
      %c0_45 = arith.constant 0 : index
      %c0_46 = arith.constant 0 : index
      %73 = vector.load %arg8[%c0_44, %c0_45, %c0_46] : memref<1x32x128xf32, #tpu.memory_space<vmem>>, vector<1x32x128xf32>
      tpu.vector_store %arg8[%c0_44, %c0_45, %c0_46], %72 {strides = array<i32>} : memref<1x32x128xf32, #tpu.memory_space<vmem>>, vector<1x32x128xf32>,
      %cst_47 = arith.constant 0.000000e+00 : f32
      %74 = vector.broadcast %cst_47 : f32 to vector<1x1x1xf32>
      %c0_48 = arith.constant 0 : index
      %c0_49 = arith.constant 0 : index
      %c0_50 = arith.constant 0 : index
      %75 = vector.load %arg9[%c0_48, %c0_49, %c0_50] : memref<1x1x1xf32, #tpu.memory_space<vmem>>, vector<1x1x1xf32>
      tpu.vector_store %arg9[%c0_48, %c0_49, %c0_50], %74 {strides = array<i32>} : memref<1x1x1xf32, #tpu.memory_space<vmem>>, vector<1x1x1xf32>,
    } else {
    }
    %c0_18 = arith.constant 0 : index
    %c0_19 = arith.constant 0 : index
    %c0_20 = arith.constant 0 : index
    %48 = vector.load %arg7[%c0_18, %c0_19, %c0_20] : memref<1x1x128xf32, #tpu.memory_space<vmem>>, vector<1x1x128xf32>
    %cst_21 = arith.constant dense<0.000000e+00> : vector<128xf32>
    %49 = vector.multi_reduction <add>, %34, %cst_21 [0] : vector<128x128xf32> to vector<128xf32>
    %50 = vector.shape_cast %49 : vector<128xf32> to vector<1x128xf32>
    %51 = vector.shape_cast %50 : vector<1x128xf32> to vector<1x1x128xf32>
    %52 = arith.addf %48, %51 : vector<1x1x128xf32>
    %c0_22 = arith.constant 0 : index
    %c0_23 = arith.constant 0 : index
    %c0_24 = arith.constant 0 : index
    %53 = vector.load %arg7[%c0_22, %c0_23, %c0_24] : memref<1x1x128xf32, #tpu.memory_space<vmem>>, vector<1x1x128xf32>
    tpu.vector_store %arg7[%c0_22, %c0_23, %c0_24], %52 {strides = array<i32>} : memref<1x1x128xf32, #tpu.memory_space<vmem>>, vector<1x1x128xf32>,
    %c0_25 = arith.constant 0 : index
    %c0_26 = arith.constant 0 : index
    %c0_27 = arith.constant 0 : index
    %54 = vector.load %arg8[%c0_25, %c0_26, %c0_27] : memref<1x32x128xf32, #tpu.memory_space<vmem>>, vector<1x32x128xf32>
    %cst_28 = arith.constant dense<0.000000e+00> : vector<32x128xf32>
    %55 = tpu.matmul %15, %34, %cst_28 {dimension_numbers = #tpu.dot_dimension_numbers<[0], [0], [1], [1], [0, 1, 1, 1], [], []>} : vector<128x32xf32>, vector<128x128xf32>, vector<32x128xf32> -> vector<32x128xf32>
    %56 = vector.shape_cast %55 : vector<32x128xf32> to vector<1x32x128xf32>
    %57 = arith.addf %54, %56 : vector<1x32x128xf32>
    %c0_29 = arith.constant 0 : index
    %c0_30 = arith.constant 0 : index
    %c0_31 = arith.constant 0 : index
    %58 = vector.load %arg8[%c0_29, %c0_30, %c0_31] : memref<1x32x128xf32, #tpu.memory_space<vmem>>, vector<1x32x128xf32>
    tpu.vector_store %arg8[%c0_29, %c0_30, %c0_31], %57 {strides = array<i32>} : memref<1x32x128xf32, #tpu.memory_space<vmem>>, vector<1x32x128xf32>,
    %59 = arith.subf %35, %15 : vector<128x32xf32>
    %c0_32 = arith.constant 0 : index
    %c0_33 = arith.constant 0 : index
    %c0_34 = arith.constant 0 : index
    %60 = vector.load %arg9[%c0_32, %c0_33, %c0_34] : memref<1x1x1xf32, #tpu.memory_space<vmem>>, vector<1x1x1xf32>
    %61 = arith.mulf %59, %59 : vector<128x32xf32>
    %62 = vector.shape_cast %61 : vector<128x32xf32> to vector<1x128x32xf32>
    %cst_35 = arith.constant dense<0.000000e+00> : vector<1xf32>
    %63 = vector.multi_reduction <add>, %62, %cst_35 [1, 2] : vector<1x128x32xf32> to vector<1xf32>
    %64 = vector.shape_cast %63 : vector<1xf32> to vector<1x1x1xf32>
    %65 = vector.extract %64[0, 0, 0] : f32 from vector<1x1x1xf32>
    %66 = vector.broadcast %65 : f32 to vector<1x1xf32>
    %67 = vector.shape_cast %66 : vector<1x1xf32> to vector<1x1x1xf32>
    %68 = arith.addf %60, %67 : vector<1x1x1xf32>
    %c0_36 = arith.constant 0 : index
    %c0_37 = arith.constant 0 : index
    %c0_38 = arith.constant 0 : index
    %69 = vector.load %arg9[%c0_36, %c0_37, %c0_38] : memref<1x1x1xf32, #tpu.memory_space<vmem>>, vector<1x1x1xf32>
    tpu.vector_store %arg9[%c0_36, %c0_37, %c0_38], %68 {strides = array<i32>} : memref<1x1x1xf32, #tpu.memory_space<vmem>>, vector<1x1x1xf32>,
    return
  }
  func.func @transform_0(%arg0: i32, %arg1: i32) -> (i32, i32) {
    %c1_i32 = arith.constant 1 : i32
    %0 = arith.muli %arg0, %c1_i32 : i32
    %1 = arith.addi %0, %arg1 : i32
    %c0_i32 = arith.constant 0 : i32
    %c0_i32_0 = arith.constant 0 : i32
    return %1, %c0_i32 : i32, i32
  }
  func.func @transform_1(%arg0: i32, %arg1: i32) -> (i32, i32) {
    %c0_i32 = arith.constant 0 : i32
    %c0_i32_0 = arith.constant 0 : i32
    %c0_i32_1 = arith.constant 0 : i32
    return %c0_i32, %c0_i32_0 : i32, i32
  }
  func.func @transform_2(%arg0: i32, %arg1: i32) -> (i32, i32) {
    %c0_i32 = arith.constant 0 : i32
    %c0_i32_0 = arith.constant 0 : i32
    %c0_i32_1 = arith.constant 0 : i32
    return %c0_i32, %c0_i32_0 : i32, i32
  }
  func.func @transform_3(%arg0: i32, %arg1: i32) -> (i32, i32) {
    %c1_i32 = arith.constant 1 : i32
    %0 = arith.muli %arg0, %c1_i32 : i32
    %1 = arith.addi %0, %arg1 : i32
    %c0_i32 = arith.constant 0 : i32
    %c0_i32_0 = arith.constant 0 : i32
    return %1, %c0_i32 : i32, i32
  }
  func.func @transform_4(%arg0: i32, %arg1: i32) -> (i32, i32) {
    %c1_i32 = arith.constant 1 : i32
    %0 = arith.muli %arg0, %c1_i32 : i32
    %1 = arith.addi %0, %arg1 : i32
    %c0_i32 = arith.constant 0 : i32
    %c0_i32_0 = arith.constant 0 : i32
    return %c0_i32, %1 : i32, i32
  }
  func.func @transform_5(%arg0: i32, %arg1: i32) -> (i32, i32, i32) {
    %c0_i32 = arith.constant 0 : i32
    %c0_i32_0 = arith.constant 0 : i32
    %c0_i32_1 = arith.constant 0 : i32
    return %arg0, %c0_i32, %c0_i32_0 : i32, i32, i32
  }
  func.func @transform_6(%arg0: i32, %arg1: i32) -> (i32, i32, i32) {
    %c0_i32 = arith.constant 0 : i32
    %c0_i32_0 = arith.constant 0 : i32
    %c0_i32_1 = arith.constant 0 : i32
    return %arg0, %c0_i32, %c0_i32_0 : i32, i32, i32
  }
  func.func @transform_7(%arg0: i32, %arg1: i32) -> (i32, i32, i32) {
    %c0_i32 = arith.constant 0 : i32
    %c0_i32_0 = arith.constant 0 : i32
    %c0_i32_1 = arith.constant 0 : i32
    return %arg0, %c0_i32, %c0_i32_0 : i32, i32, i32
  }
}

</mosaic_0001>

<llo_original>
// kernel: squeeze.2
$region0: #{squeeze.2}
  %s0 = inlined_call_operand.vmem [shape: s32[16], index: 0, kind: input, shape index: {}]
  %s1 = inlined_call_operand.hbm [shape: s32[2,8], index: 1, kind: output, shape index: {}]
  $region1: #{squeeze.2} parent=0
    #allocation0 [shape = 'u8[1024]{0}', space=vmem, size = 0x400, scoped, tag = 'operand span for operand 1']
    #allocation1 [shape = 's32[1]{0}', space=sflag, size = 0x4, scoped, tag = 'scoped memory for squeeze.2']
    #allocation2 [shape = 'u8[4096]{0}', space=vmem, size = 0x1000, scoped, tag = 'scoped mem for output reshape']
    #allocation3 [shape = 'u8[4096]{0}', space=vmem, size = 0x1000, scoped, tag = 'scoped mem for input reshape']
    %2 = vsyncpa [#allocation1], 0
    %s4 = sshll.u32 1, 1
    %s5 = ssub.s32 %s4, 1
    %v6 = vld [vmem:[%s0] sm:%s5]
    %7 = vst [vmem:[#allocation3] sm:%s5] %v6
    %v8 = vld [vmem:[#allocation3] sm:$0x1]
    %vm9 = vcmask 64512
    %10 = vst.msk [vmem:[#allocation2] sm:$0x1] %vm9, %v8
    %v11 = vld [vmem:[#allocation3] sm:$0x1]
    %12 = vrot.lane.b32.xlu0 %v11, 120
    %v13 = vpop.permute.xlu0 %12
    %vm14 = vcmask 64512
    %s15 = scalar_lea.vmem [#allocation2], 1
    %16 = vst.msk [vmem:[%s15] sm:$0x1] %vm14, %v13
    %s18 = sshll.u32 1, 2
    %s19 = ssub.s32 %s18, 1
    %v21 = vld [vmem:[#allocation2] sm:%s19]
    %s22 = sshll.u32 1, 2
    %s23 = ssub.s32 %s22, 1
    %24 = vst [vmem:[#allocation0] sm:%s23] %v21
    %s26 = ssub.s32 32, 32
    %27 = vsyncadd [#allocation1], %s26
    %s29 = sshll.u32 [#allocation0], 4
    %s30 = int_to_ptr.vmem [resolvable:$true] %s29
    %32 = dma.vmem_to_hbm [thread:$0]  %s30, 32, %s1, [#allocation1]
    %33 = dma.done [#allocation1], 32
    %34 = vsyncpa [#allocation1], 1

// kernel: _quantize_forward_impl.1
$region0: #{_quantize_forward_impl.1}
  #allocation0 [shape = 'u32[]', space=smem, size = 0x4, offset = 0x4, fixed_abs, tag = 'smem constant byte address 0x4 - core index']
  #allocation1 [shape = 'u32[144,128]{1,0:T(1,128)}', space=vmem, size = 0x12000, scoped, tag = 'internal scratch']
  %s0 = inlined_call_operand.vmem [shape: f32[128,32], index: 0, kind: input, shape index: {}]
  %s1 = inlined_call_operand.vmem [shape: f32[32,128], index: 1, kind: input, shape index: {}]
  %s2 = inlined_call_operand.vmem [shape: f32[1,128], index: 2, kind: input, shape index: {}]
  %s3 = inlined_call_operand.vmem [shape: f32[128,32], index: 3, kind: output, shape index: {0}]
  %s4 = inlined_call_operand.vmem [shape: s32[1,128], index: 4, kind: output, shape index: {1}]
  %s5 = inlined_call_operand.vmem [shape: f32[1,1,128], index: 5, kind: output, shape index: {2}]
  %s6 = inlined_call_operand.hbm [shape: f32[1,32,128], index: 6, kind: output, shape index: {3}]
  %s7 = inlined_call_operand.hbm [shape: f32[1,1,1], index: 7, kind: output, shape index: {4}]
  %8 = xla_tuple %s3, %s4, %s5, %s6, %s7
  %s9 = sld [smem:[#allocation0]]
  $region58: #{_quantize_forward_impl.1} parent=0
    _
  %s11 = ssub.s32 1, %s9
  %s12 = scalar_select 0, %s11, %s9
  $region1: #{_quantize_forward_impl.1} parent=0
    #allocation2 [shape = 'u8[16384]{0}', space=vmem, size = 0x4000, scoped, tag = 'output window, operand 3, single buffered']
    #allocation3 [shape = 's32[1]{0}', space=sflag, size = 0x4, scoped, tag = 'scoped memory for _quantize_forward_impl.1']
    #allocation4 [shape = 'u8[512]{0}', space=vmem, size = 0x400, scoped, tag = 'output window, operand 4, single buffered']
    #allocation5 [shape = 's32[1]{0}', space=sflag, size = 0x4, scoped, tag = 'scoped memory for _quantize_forward_impl.1']
    %13 = vsyncpa [#allocation3], 0
    %14 = vsyncpa [#allocation5], 0
    // Predicated region
    $region2: #{_quantize_forward_impl.1} parent=1 // pred_check
      _
    $region3: #{_quantize_forward_impl.1} parent=1 // pred_check_branch
      %16 = sbr.rel (0) target = $region5
    $region4: #{_quantize_forward_impl.1} parent=1 // pred_region
      %s17 = sadd.s32 0, 0
      %s18 = smul.u32 16, %s17
      %p19 = scmp.lt.s32.totalorder %s18, 15
      %s20 = scalar_select %p19, %s18, 15
      %s21 = smul.addr %s20, 8
      %s22 = scalar_lea.vmem %s0, %s21
      %s23 = sadd.s32 0, 0
      %s24 = smul.u32 16, %s23
    $region5: #{_quantize_forward_impl.1} parent=1 // pred_fallthru
      _
    // Predicated region
    $region6: #{_quantize_forward_impl.1} parent=1 // pred_check
      _
    $region7: #{_quantize_forward_impl.1} parent=1 // pred_check_branch
      %26 = sbr.rel (0) target = $region9
    $region8: #{_quantize_forward_impl.1} parent=1 // pred_region
      _
    $region9: #{_quantize_forward_impl.1} parent=1 // pred_fallthru
      _
    // Predicated region
    $region10: #{_quantize_forward_impl.1} parent=1 // pred_check
      _
    $region11: #{_quantize_forward_impl.1} parent=1 // pred_check_branch
      %28 = sbr.rel (0) target = $region13
    $region12: #{_quantize_forward_impl.1} parent=1 // pred_region
      _
    $region13: #{_quantize_forward_impl.1} parent=1 // pred_fallthru
      _
    %s29 = sadd.s32 0, 0
    %s30 = smul.u32 16, %s29
    %p31 = scmp.lt.s32.totalorder %s30, 15
    %s32 = scalar_select %p31, %s30, 15
    %s33 = smul.addr %s32, 8
    %s34 = scalar_lea.vmem %s0, %s33
    %s35 = sadd.s32 0, 0
    %s36 = smul.u32 16, %s35
    %p37 = scmp.lt.s32.totalorder %s36, 15
    %s38 = scalar_select %p37, %s36, 15
    %s39 = smul.addr %s38, 8
    %s40 = scalar_lea.vmem %s3, %s39
    %s41 = sadd.s32 0, 0
    %p42 = scmp.lt.s32.totalorder %s41, 0
    %s43 = scalar_select %p42, %s41, 0
    %s44 = scalar_lea.vmem %s4, %s43
    %s45 = sadd.s32 0, 0
    %s46 = smul.u32 16, %s45
    %p47 = scmp.lt.s32.totalorder %s46, 15
    %s48 = scalar_select %p47, %s46, 15
    %s49 = smul.addr %s48, 8
    %s50 = scalar_lea.vmem %s0, %s49
    %s51 = sadd.s32 0, 0
    %s52 = smul.u32 16, %s51
    %s53 = sadd.s32 0, 0
    %s54 = smul.u32 16, %s53
    %p55 = scmp.lt.s32.totalorder %s54, 15
    %s56 = scalar_select %p55, %s54, 15
    %s57 = smul.addr %s56, 8
    %s58 = scalar_lea.vmem %s3, %s57
    %s59 = sadd.s32 0, 0
    %s60 = smul.u32 16, %s59
    %s61 = sadd.s32 0, 0
    %p62 = scmp.lt.s32.totalorder %s61, 0
    %s63 = scalar_select %p62, %s61, 0
    %s64 = scalar_lea.vmem %s4, %s63
    %s65 = sadd.s32 0, 0
    %v67 = vld [vmem:[%s50] sm:$0xff]
    %v68 = vld [vmem:[%s50 + $0x8] sm:$0xff]
    %v69 = vld [vmem:[%s50 + $0x10] sm:$0xff]
    %v70 = vld [vmem:[%s50 + $0x18] sm:$0xff]
    %v71 = vld [vmem:[%s50 + $0x20] sm:$0xff]
    %v72 = vld [vmem:[%s50 + $0x28] sm:$0xff]
    %v73 = vld [vmem:[%s50 + $0x30] sm:$0xff]
    %v74 = vld [vmem:[%s50 + $0x38] sm:$0xff]
    %v75 = vld [vmem:[%s50 + $0x40] sm:$0xff]
    %v76 = vld [vmem:[%s50 + $0x48] sm:$0xff]
    %v77 = vld [vmem:[%s50 + $0x50] sm:$0xff]
    %v78 = vld [vmem:[%s50 + $0x58] sm:$0xff]
    %v79 = vld [vmem:[%s50 + $0x60] sm:$0xff]
    %v80 = vld [vmem:[%s50 + $0x68] sm:$0xff]
    %v81 = vld [vmem:[%s50 + $0x70] sm:$0xff]
    %v82 = vld [vmem:[%s50 + $0x78] sm:$0xff]
    %v83 = vld [vmem:[%s1] sm:$0xff]
    %v84 = vld [vmem:[%s1 + $0x8] sm:$0xff]
    %v85 = vld [vmem:[%s1 + $0x10] sm:$0xff]
    %v86 = vld [vmem:[%s1 + $0x18] sm:$0xff]
    %v87 = vld [vmem:[%s2] sm:$0x1]
    %v88 = vlaneseq
    %v89 = vand.u32 %v88, 127
    %s90 = sadd.s32 0, 0
    %s91 = smul.u32 %s90, 128
    %v92 = vlaneseq
    %v93 = vshrl.u32 %v92, 7
    %v94 = vadd.s32 %v93, 8
    %v95 = vadd.s32 %v93, 16
    %v96 = vadd.s32 %v93, 24
    %v97 = vadd.s32 %v93, 32
    %v98 = vadd.s32 %v93, 40
    %v99 = vadd.s32 %v93, 48
    %v100 = vadd.s32 %v93, 56
    %v101 = vadd.s32 %v93, 64
    %v102 = vadd.s32 %v93, 72
    %v103 = vadd.s32 %v93, 80
    %v104 = vadd.s32 %v93, 88
    %v105 = vadd.s32 %v93, 96
    %v106 = vadd.s32 %v93, 104
    %v107 = vadd.s32 %v93, 112
    %v108 = vadd.s32 %v93, 120
    %v109 = vstv %s91
    %v110 = vadd.s32 %v93, %v109
    %v111 = vadd.s32 %v94, %v109
    %v112 = vadd.s32 %v95, %v109
    %v113 = vadd.s32 %v96, %v109
    %v114 = vadd.s32 %v97, %v109
    %v115 = vadd.s32 %v98, %v109
    %v116 = vadd.s32 %v99, %v109
    %v117 = vadd.s32 %v100, %v109
    %v118 = vadd.s32 %v101, %v109
    %v119 = vadd.s32 %v102, %v109
    %v120 = vadd.s32 %v103, %v109
    %v121 = vadd.s32 %v104, %v109
    %v122 = vadd.s32 %v105, %v109
    %v123 = vadd.s32 %v106, %v109
    %v124 = vadd.s32 %v107, %v109
    %v125 = vadd.s32 %v108, %v109
    %vm126 = vcmp.lt.s32.totalorder %v110, 16
    %vm127 = vcmp.lt.s32.totalorder %v111, 16
    %vm128 = vcmp.lt.s32.totalorder %v112, 16
    %vm129 = vcmp.lt.s32.totalorder %v113, 16
    %vm130 = vcmp.lt.s32.totalorder %v114, 16
    %vm131 = vcmp.lt.s32.totalorder %v115, 16
    %vm132 = vcmp.lt.s32.totalorder %v116, 16
    %vm133 = vcmp.lt.s32.totalorder %v117, 16
    %vm134 = vcmp.lt.s32.totalorder %v118, 16
    %vm135 = vcmp.lt.s32.totalorder %v119, 16
    %vm136 = vcmp.lt.s32.totalorder %v120, 16
    %vm137 = vcmp.lt.s32.totalorder %v121, 16
    %vm138 = vcmp.lt.s32.totalorder %v122, 16
    %vm139 = vcmp.lt.s32.totalorder %v123, 16
    %vm140 = vcmp.lt.s32.totalorder %v124, 16
    %vm141 = vcmp.lt.s32.totalorder %v125, 16
    %v142 = vsel %vm126, 1, 0
    %v143 = vsel %vm127, 1, 0
    %v144 = vsel %vm128, 1, 0
    %v145 = vsel %vm129, 1, 0
    %v146 = vsel %vm130, 1, 0
    %v147 = vsel %vm131, 1, 0
    %v148 = vsel %vm132, 1, 0
    %v149 = vsel %vm133, 1, 0
    %v150 = vsel %vm134, 1, 0
    %v151 = vsel %vm135, 1, 0
    %v152 = vsel %vm136, 1, 0
    %v153 = vsel %vm137, 1, 0
    %v154 = vsel %vm138, 1, 0
    %v155 = vsel %vm139, 1, 0
    %v156 = vsel %vm140, 1, 0
    %v157 = vsel %vm141, 1, 0
    %vm158 = vcmp.eq.s32.totalorder %v142, 1
    %vm159 = vcmp.eq.s32.totalorder %v143, 1
    %vm160 = vcmp.eq.s32.totalorder %v144, 1
    %vm161 = vcmp.eq.s32.totalorder %v145, 1
    %vm162 = vcmp.eq.s32.totalorder %v146, 1
    %vm163 = vcmp.eq.s32.totalorder %v147, 1
    %vm164 = vcmp.eq.s32.totalorder %v148, 1
    %vm165 = vcmp.eq.s32.totalorder %v149, 1
    %vm166 = vcmp.eq.s32.totalorder %v150, 1
    %vm167 = vcmp.eq.s32.totalorder %v151, 1
    %vm168 = vcmp.eq.s32.totalorder %v152, 1
    %vm169 = vcmp.eq.s32.totalorder %v153, 1
    %vm170 = vcmp.eq.s32.totalorder %v154, 1
    %vm171 = vcmp.eq.s32.totalorder %v155, 1
    %vm172 = vcmp.eq.s32.totalorder %v156, 1
    %vm173 = vcmp.eq.s32.totalorder %v157, 1
    %v174 = vsel %vm158, %v67, 0.0
    %v175 = vsel %vm159, %v68, 0.0
    %v176 = vsel %vm160, %v69, 0.0
    %v177 = vsel %vm161, %v70, 0.0
    %v178 = vsel %vm162, %v71, 0.0
    %v179 = vsel %vm163, %v72, 0.0
    %v180 = vsel %vm164, %v73, 0.0
    %v181 = vsel %vm165, %v74, 0.0
    %v182 = vsel %vm166, %v75, 0.0
    %v183 = vsel %vm167, %v76, 0.0
    %v184 = vsel %vm168, %v77, 0.0
    %v185 = vsel %vm169, %v78, 0.0
    %v186 = vsel %vm170, %v79, 0.0
    %v187 = vsel %vm171, %v80, 0.0
    %v188 = vsel %vm172, %v81, 0.0
    %v189 = vsel %vm173, %v82, 0.0
    %v191 = vlaneseq
    %v192 = vshrl.u32 %v191, 7
    %v193 = vsub.s32 0, %v192
    %v194 = vrot.slane %v87, %v193
    %vm196 = vcmask 261120
    %v198 = vsel %vm196, %v174, 0
    %v201 = vsel %vm196, %v175, 0
    %v204 = vsel %vm196, %v176, 0
    %v207 = vsel %vm196, %v177, 0
    %v210 = vsel %vm196, %v178, 0
    %v213 = vsel %vm196, %v179, 0
    %v216 = vsel %vm196, %v180, 0
    %v219 = vsel %vm196, %v181, 0
    %v222 = vsel %vm196, %v182, 0
    %v225 = vsel %vm196, %v183, 0
    %v228 = vsel %vm196, %v184, 0
    %v231 = vsel %vm196, %v185, 0
    %v234 = vsel %vm196, %v186, 0
    %v237 = vsel %vm196, %v187, 0
    %v240 = vsel %vm196, %v188, 0
    %v243 = vsel %vm196, %v189, 0
    %245 = vmatprep.subr.mxu0 0.0
    %246 = vmatpush1.msra.mxu0 0.0
    %247 = vmatprep.subr.mxu0 0.0
    %248 = vmatpush1.msra.mxu0 0.0
    %249 = vmatprep.subr.mxu0 0.0
    %250 = vmatpush1.msra.mxu0 0.0
    %251 = vmatprep.subr.mxu0 0.0
    %252 = vmatpush1.msra.mxu0 0.0
    %253 = vmatprep.subr.mxu0 0.0
    %254 = vmatpush1.msra.mxu0 0.0
    %255 = vmatprep.subr.mxu0 0.0
    %256 = vmatpush1.msra.mxu0 0.0
    %257 = vmatprep.subr.mxu0 0.0
    %258 = vmatpush1.msra.mxu0 0.0
    %259 = vmatprep.subr.mxu0 0.0
    %260 = vmatpush1.msra.mxu0 0.0
    %261 = vmatprep.subr.mxu0 0.0
    %262 = vmatpush1.msra.mxu0 0.0
    %263 = vmatprep.subr.mxu0 0.0
    %264 = vmatpush1.msra.mxu0 0.0
    %265 = vmatprep.subr.mxu0 0.0
    %266 = vmatpush1.msra.mxu0 0.0
    %267 = vmatprep.subr.mxu0 0.0
    %268 = vmatpush1.msra.mxu0 0.0
    %269 = vmatprep.subr.mxu0 0.0
    %270 = vmatpush1.msra.mxu0 %v86
    %271 = vmatprep.subr.mxu0 0.0
    %272 = vmatpush1.msra.mxu0 %v85
    %273 = vmatprep.subr.mxu0 0.0
    %274 = vmatpush1.msra.mxu0 %v84
    %275 = vmatprep.subr.mxu0 0.0
    %276 = vmatpush1.msra.mxu0 %v83
    %277 = vmatprep.subr.mxu0 0.0
    %278 = vmatpush2.msra.mxu0 0.0
    %279 = vmatprep.subr.mxu0 0.0
    %280 = vmatpush2.msra.mxu0 0.0
    %281 = vmatprep.subr.mxu0 0.0
    %282 = vmatpush2.msra.mxu0 0.0
    %283 = vmatprep.subr.mxu0 0.0
    %284 = vmatpush2.msra.mxu0 0.0
    %285 = vmatprep.subr.mxu0 0.0
    %286 = vmatpush2.msra.mxu0 0.0
    %287 = vmatprep.subr.mxu0 0.0
    %288 = vmatpush2.msra.mxu0 0.0
    %289 = vmatprep.subr.mxu0 0.0
    %290 = vmatpush2.msra.mxu0 0.0
    %291 = vmatprep.subr.mxu0 0.0
    %292 = vmatpush2.msra.mxu0 0.0
    %293 = vmatprep.subr.mxu0 0.0
    %294 = vmatpush2.msra.mxu0 0.0
    %295 = vmatprep.subr.mxu0 0.0
    %296 = vmatpush2.msra.mxu0 0.0
    %297 = vmatprep.subr.mxu0 0.0
    %298 = vmatpush2.msra.mxu0 0.0
    %299 = vmatprep.subr.mxu0 0.0
    %300 = vmatpush2.msra.mxu0 0.0
    %301 = vmatprep.subr.mxu0 0.0
    %302 = vmatpush2.msra.mxu0 0.0
    %303 = vmatprep.subr.mxu0 0.0
    %304 = vmatpush2.msra.mxu0 0.0
    %305 = vmatprep.subr.mxu0 0.0
    %306 = vmatpush2.msra.mxu0 0.0
    %307 = vmatprep.subr.mxu0 0.0
    %308 = vmatpush2.msra.mxu0 0.0
    %309 = vmatprep.mubr.f32.mxu0 0.0
    %310 = vmatmul.mubr.f32.gmra.mxu0 %v198
    %v311 = vpop.f32.mrf.mxu0
    %v312 = vadd.f32 %v194, %v311
    %v313 = vpop.f32.mrf.mxu0
    %314 = vmatprep.mubr.f32.mxu0 0.0
    %315 = vmatmul.mubr.f32.gmra.mxu0 %v201
    %v316 = vpop.f32.mrf.mxu0
    %v317 = vadd.f32 %v194, %v316
    %v318 = vpop.f32.mrf.mxu0
    %319 = vmatprep.mubr.f32.mxu0 0.0
    %320 = vmatmul.mubr.f32.gmra.mxu0 %v204
    %v321 = vpop.f32.mrf.mxu0
    %v322 = vadd.f32 %v194, %v321
    %v323 = vpop.f32.mrf.mxu0
    %324 = vmatprep.mubr.f32.mxu0 0.0
    %325 = vmatmul.mubr.f32.gmra.mxu0 %v207
    %v326 = vpop.f32.mrf.mxu0
    %v327 = vadd.f32 %v194, %v326
    %v328 = vpop.f32.mrf.mxu0
    %329 = vmatprep.mubr.f32.mxu0 0.0
    %330 = vmatmul.mubr.f32.gmra.mxu0 %v210
    %v331 = vpop.f32.mrf.mxu0
    %v332 = vadd.f32 %v194, %v331
    %v333 = vpop.f32.mrf.mxu0
    %334 = vmatprep.mubr.f32.mxu0 0.0
    %335 = vmatmul.mubr.f32.gmra.mxu0 %v213
    %v336 = vpop.f32.mrf.mxu0
    %v337 = vadd.f32 %v194, %v336
    %v338 = vpop.f32.mrf.mxu0
    %339 = vmatprep.mubr.f32.mxu0 0.0
    %340 = vmatmul.mubr.f32.gmra.mxu0 %v216
    %v341 = vpop.f32.mrf.mxu0
    %v342 = vadd.f32 %v194, %v341
    %v343 = vpop.f32.mrf.mxu0
    %344 = vmatprep.mubr.f32.mxu0 0.0
    %345 = vmatmul.mubr.f32.gmra.mxu0 %v219
    %v346 = vpop.f32.mrf.mxu0
    %v347 = vadd.f32 %v194, %v346
    %v348 = vpop.f32.mrf.mxu0
    %349 = vmatprep.mubr.f32.mxu0 0.0
    %350 = vmatmul.mubr.f32.gmra.mxu0 %v222
    %v351 = vpop.f32.mrf.mxu0
    %v352 = vadd.f32 %v194, %v351
    %v353 = vpop.f32.mrf.mxu0
    %354 = vmatprep.mubr.f32.mxu0 0.0
    %355 = vmatmul.mubr.f32.gmra.mxu0 %v225
    %v356 = vpop.f32.mrf.mxu0
    %v357 = vadd.f32 %v194, %v356
    %v358 = vpop.f32.mrf.mxu0
    %359 = vmatprep.mubr.f32.mxu0 0.0
    %360 = vmatmul.mubr.f32.gmra.mxu0 %v228
    %v361 = vpop.f32.mrf.mxu0
    %v362 = vadd.f32 %v194, %v361
    %v363 = vpop.f32.mrf.mxu0
    %364 = vmatprep.mubr.f32.mxu0 0.0
    %365 = vmatmul.mubr.f32.gmra.mxu0 %v231
    %v366 = vpop.f32.mrf.mxu0
    %v367 = vadd.f32 %v194, %v366
    %v368 = vpop.f32.mrf.mxu0
    %369 = vmatprep.mubr.f32.mxu0 0.0
    %370 = vmatmul.mubr.f32.gmra.mxu0 %v234
    %v371 = vpop.f32.mrf.mxu0
    %v372 = vadd.f32 %v194, %v371
    %v373 = vpop.f32.mrf.mxu0
    %374 = vmatprep.mubr.f32.mxu0 0.0
    %375 = vmatmul.mubr.f32.gmra.mxu0 %v237
    %v376 = vpop.f32.mrf.mxu0
    %v377 = vadd.f32 %v194, %v376
    %v378 = vpop.f32.mrf.mxu0
    %379 = vmatprep.mubr.f32.mxu0 0.0
    %380 = vmatmul.mubr.f32.gmra.mxu0 %v240
    %v381 = vpop.f32.mrf.mxu0
    %v382 = vadd.f32 %v194, %v381
    %v383 = vpop.f32.mrf.mxu0
    %384 = vmatprep.mubr.f32.mxu0 0.0
    %385 = vmatmul.mubr.f32.gmra.mxu0 %v243
    %v386 = vpop.f32.mrf.mxu0
    %v387 = vadd.f32 %v194, %v386
    %v388 = vpop.f32.mrf.mxu0
    %389 = vdwg.mxu0
    %390 = vmax.xlane.f32.xlu0 %v312
    %v391 = vpop.xlane.xlu0 %390
    %392 = vmax.xlane.f32.xlu0 %v317
    %v393 = vpop.xlane.xlu0 %392
    %394 = vmax.xlane.f32.xlu0 %v322
    %v395 = vpop.xlane.xlu0 %394
    %396 = vmax.xlane.f32.xlu0 %v327
    %v397 = vpop.xlane.xlu0 %396
    %398 = vmax.xlane.f32.xlu0 %v332
    %v399 = vpop.xlane.xlu0 %398
    %400 = vmax.xlane.f32.xlu0 %v337
    %v401 = vpop.xlane.xlu0 %400
    %402 = vmax.xlane.f32.xlu0 %v342
    %v403 = vpop.xlane.xlu0 %402
    %404 = vmax.xlane.f32.xlu0 %v347
    %v405 = vpop.xlane.xlu0 %404
    %406 = vmax.xlane.f32.xlu0 %v352
    %v407 = vpop.xlane.xlu0 %406
    %408 = vmax.xlane.f32.xlu0 %v357
    %v409 = vpop.xlane.xlu0 %408
    %410 = vmax.xlane.f32.xlu0 %v362
    %v411 = vpop.xlane.xlu0 %410
    %412 = vmax.xlane.f32.xlu0 %v367
    %v413 = vpop.xlane.xlu0 %412
    %414 = vmax.xlane.f32.xlu0 %v372
    %v415 = vpop.xlane.xlu0 %414
    %416 = vmax.xlane.f32.xlu0 %v377
    %v417 = vpop.xlane.xlu0 %416
    %418 = vmax.xlane.f32.xlu0 %v382
    %v419 = vpop.xlane.xlu0 %418
    %420 = vmax.xlane.f32.xlu0 %v387
    %v421 = vpop.xlane.xlu0 %420
    %vm422 = vcmp.ge.f32.partialorder %v312, %v391
    %vm423 = vcmp.ge.f32.partialorder %v317, %v393
    %vm424 = vcmp.ge.f32.partialorder %v322, %v395
    %vm425 = vcmp.ge.f32.partialorder %v327, %v397
    %vm426 = vcmp.ge.f32.partialorder %v332, %v399
    %vm427 = vcmp.ge.f32.partialorder %v337, %v401
    %vm428 = vcmp.ge.f32.partialorder %v342, %v403
    %vm429 = vcmp.ge.f32.partialorder %v347, %v405
    %vm430 = vcmp.ge.f32.partialorder %v352, %v407
    %vm431 = vcmp.ge.f32.partialorder %v357, %v409
    %vm432 = vcmp.ge.f32.partialorder %v362, %v411
    %vm433 = vcmp.ge.f32.partialorder %v367, %v413
    %vm434 = vcmp.ge.f32.partialorder %v372, %v415
    %vm435 = vcmp.ge.f32.partialorder %v377, %v417
    %vm436 = vcmp.ge.f32.partialorder %v382, %v419
    %vm437 = vcmp.ge.f32.partialorder %v387, %v421
    %v438 = vsel %vm422, %v89, 128
    %v439 = vsel %vm423, %v89, 128
    %v440 = vsel %vm424, %v89, 128
    %v441 = vsel %vm425, %v89, 128
    %v442 = vsel %vm426, %v89, 128
    %v443 = vsel %vm427, %v89, 128
    %v444 = vsel %vm428, %v89, 128
    %v445 = vsel %vm429, %v89, 128
    %v446 = vsel %vm430, %v89, 128
    %v447 = vsel %vm431, %v89, 128
    %v448 = vsel %vm432, %v89, 128
    %v449 = vsel %vm433, %v89, 128
    %v450 = vsel %vm434, %v89, 128
    %v451 = vsel %vm435, %v89, 128
    %v452 = vsel %vm436, %v89, 128
    %v453 = vsel %vm437, %v89, 128
    %v454 = vand.u32 %v438, 65535
    %v455 = vshra.s32 %v438, 16
    %v456 = vcvt.s32.f32 %v454
    %v457 = vcvt.s32.f32 %v455
    %458 = vmin.xlane.f32.xlu0 %v457
    %v459 = vpop.xlane.xlu0 %458
    %vm460 = vcmp.eq.f32.partialorder %v457, %v459
    %v461 = vsel %vm460, %v456, inf
    %462 = vmin.xlane.f32.xlu0 %v461
    %v463 = vpop.xlane.xlu0 %462
    %v464 = vcvt.f32.s32 %v463
    %v465 = vcvt.f32.s32 %v459
    %v466 = vshll.u32 %v465, 16
    %v467 = vadd.s32 %v466, %v464
    %v468 = vand.u32 %v439, 65535
    %v469 = vshra.s32 %v439, 16
    %v470 = vcvt.s32.f32 %v468
    %v471 = vcvt.s32.f32 %v469
    %472 = vmin.xlane.f32.xlu0 %v471
    %v473 = vpop.xlane.xlu0 %472
    %vm474 = vcmp.eq.f32.partialorder %v471, %v473
    %v475 = vsel %vm474, %v470, inf
    %476 = vmin.xlane.f32.xlu0 %v475
    %v477 = vpop.xlane.xlu0 %476
    %v478 = vcvt.f32.s32 %v477
    %v479 = vcvt.f32.s32 %v473
    %v480 = vshll.u32 %v479, 16
    %v481 = vadd.s32 %v480, %v478
    %v482 = vand.u32 %v440, 65535
    %v483 = vshra.s32 %v440, 16
    %v484 = vcvt.s32.f32 %v482
    %v485 = vcvt.s32.f32 %v483
    %486 = vmin.xlane.f32.xlu0 %v485
    %v487 = vpop.xlane.xlu0 %486
    %vm488 = vcmp.eq.f32.partialorder %v485, %v487
    %v489 = vsel %vm488, %v484, inf
    %490 = vmin.xlane.f32.xlu0 %v489
    %v491 = vpop.xlane.xlu0 %490
    %v492 = vcvt.f32.s32 %v491
    %v493 = vcvt.f32.s32 %v487
    %v494 = vshll.u32 %v493, 16
    %v495 = vadd.s32 %v494, %v492
    %v496 = vand.u32 %v441, 65535
    %v497 = vshra.s32 %v441, 16
    %v498 = vcvt.s32.f32 %v496
    %v499 = vcvt.s32.f32 %v497
    %500 = vmin.xlane.f32.xlu0 %v499
    %v501 = vpop.xlane.xlu0 %500
    %vm502 = vcmp.eq.f32.partialorder %v499, %v501
    %v503 = vsel %vm502, %v498, inf
    %504 = vmin.xlane.f32.xlu0 %v503
    %v505 = vpop.xlane.xlu0 %504
    %v506 = vcvt.f32.s32 %v505
    %v507 = vcvt.f32.s32 %v501
    %v508 = vshll.u32 %v507, 16
    %v509 = vadd.s32 %v508, %v506
    %v510 = vand.u32 %v442, 65535
    %v511 = vshra.s32 %v442, 16
    %v512 = vcvt.s32.f32 %v510
    %v513 = vcvt.s32.f32 %v511
    %514 = vmin.xlane.f32.xlu0 %v513
    %v515 = vpop.xlane.xlu0 %514
    %vm516 = vcmp.eq.f32.partialorder %v513, %v515
    %v517 = vsel %vm516, %v512, inf
    %518 = vmin.xlane.f32.xlu0 %v517
    %v519 = vpop.xlane.xlu0 %518
    %v520 = vcvt.f32.s32 %v519
    %v521 = vcvt.f32.s32 %v515
    %v522 = vshll.u32 %v521, 16
    %v523 = vadd.s32 %v522, %v520
    %v524 = vand.u32 %v443, 65535
    %v525 = vshra.s32 %v443, 16
    %v526 = vcvt.s32.f32 %v524
    %v527 = vcvt.s32.f32 %v525
    %528 = vmin.xlane.f32.xlu0 %v527
    %v529 = vpop.xlane.xlu0 %528
    %vm530 = vcmp.eq.f32.partialorder %v527, %v529
    %v531 = vsel %vm530, %v526, inf
    %532 = vmin.xlane.f32.xlu0 %v531
    %v533 = vpop.xlane.xlu0 %532
    %v534 = vcvt.f32.s32 %v533
    %v535 = vcvt.f32.s32 %v529
    %v536 = vshll.u32 %v535, 16
    %v537 = vadd.s32 %v536, %v534
    %v538 = vand.u32 %v444, 65535
    %v539 = vshra.s32 %v444, 16
    %v540 = vcvt.s32.f32 %v538
    %v541 = vcvt.s32.f32 %v539
    %542 = vmin.xlane.f32.xlu0 %v541
    %v543 = vpop.xlane.xlu0 %542
    %vm544 = vcmp.eq.f32.partialorder %v541, %v543
    %v545 = vsel %vm544, %v540, inf
    %546 = vmin.xlane.f32.xlu0 %v545
    %v547 = vpop.xlane.xlu0 %546
    %v548 = vcvt.f32.s32 %v547
    %v549 = vcvt.f32.s32 %v543
    %v550 = vshll.u32 %v549, 16
    %v551 = vadd.s32 %v550, %v548
    %v552 = vand.u32 %v445, 65535
    %v553 = vshra.s32 %v445, 16
    %v554 = vcvt.s32.f32 %v552
    %v555 = vcvt.s32.f32 %v553
    %556 = vmin.xlane.f32.xlu0 %v555
    %v557 = vpop.xlane.xlu0 %556
    %vm558 = vcmp.eq.f32.partialorder %v555, %v557
    %v559 = vsel %vm558, %v554, inf
    %560 = vmin.xlane.f32.xlu0 %v559
    %v561 = vpop.xlane.xlu0 %560
    %v562 = vcvt.f32.s32 %v561
    %v563 = vcvt.f32.s32 %v557
    %v564 = vshll.u32 %v563, 16
    %v565 = vadd.s32 %v564, %v562
    %v566 = vand.u32 %v446, 65535
    %v567 = vshra.s32 %v446, 16
    %v568 = vcvt.s32.f32 %v566
    %v569 = vcvt.s32.f32 %v567
    %570 = vmin.xlane.f32.xlu0 %v569
    %v571 = vpop.xlane.xlu0 %570
    %vm572 = vcmp.eq.f32.partialorder %v569, %v571
    %v573 = vsel %vm572, %v568, inf
    %574 = vmin.xlane.f32.xlu0 %v573
    %v575 = vpop.xlane.xlu0 %574
    %v576 = vcvt.f32.s32 %v575
    %v577 = vcvt.f32.s32 %v571
    %v578 = vshll.u32 %v577, 16
    %v579 = vadd.s32 %v578, %v576
    %v580 = vand.u32 %v447, 65535
    %v581 = vshra.s32 %v447, 16
    %v582 = vcvt.s32.f32 %v580
    %v583 = vcvt.s32.f32 %v581
    %584 = vmin.xlane.f32.xlu0 %v583
    %v585 = vpop.xlane.xlu0 %584
    %vm586 = vcmp.eq.f32.partialorder %v583, %v585
    %v587 = vsel %vm586, %v582, inf
    %588 = vmin.xlane.f32.xlu0 %v587
    %v589 = vpop.xlane.xlu0 %588
    %v590 = vcvt.f32.s32 %v589
    %v591 = vcvt.f32.s32 %v585
    %v592 = vshll.u32 %v591, 16
    %v593 = vadd.s32 %v592, %v590
    %v594 = vand.u32 %v448, 65535
    %v595 = vshra.s32 %v448, 16
    %v596 = vcvt.s32.f32 %v594
    %v597 = vcvt.s32.f32 %v595
    %598 = vmin.xlane.f32.xlu0 %v597
    %v599 = vpop.xlane.xlu0 %598
    %vm600 = vcmp.eq.f32.partialorder %v597, %v599
    %v601 = vsel %vm600, %v596, inf
    %602 = vmin.xlane.f32.xlu0 %v601
    %v603 = vpop.xlane.xlu0 %602
    %v604 = vcvt.f32.s32 %v603
    %v605 = vcvt.f32.s32 %v599
    %v606 = vshll.u32 %v605, 16
    %v607 = vadd.s32 %v606, %v604
    %v608 = vand.u32 %v449, 65535
    %v609 = vshra.s32 %v449, 16
    %v610 = vcvt.s32.f32 %v608
    %v611 = vcvt.s32.f32 %v609
    %612 = vmin.xlane.f32.xlu0 %v611
    %v613 = vpop.xlane.xlu0 %612
    %vm614 = vcmp.eq.f32.partialorder %v611, %v613
    %v615 = vsel %vm614, %v610, inf
    %616 = vmin.xlane.f32.xlu0 %v615
    %v617 = vpop.xlane.xlu0 %616
    %v618 = vcvt.f32.s32 %v617
    %v619 = vcvt.f32.s32 %v613
    %v620 = vshll.u32 %v619, 16
    %v621 = vadd.s32 %v620, %v618
    %v622 = vand.u32 %v450, 65535
    %v623 = vshra.s32 %v450, 16
    %v624 = vcvt.s32.f32 %v622
    %v625 = vcvt.s32.f32 %v623
    %626 = vmin.xlane.f32.xlu0 %v625
    %v627 = vpop.xlane.xlu0 %626
    %vm628 = vcmp.eq.f32.partialorder %v625, %v627
    %v629 = vsel %vm628, %v624, inf
    %630 = vmin.xlane.f32.xlu0 %v629
    %v631 = vpop.xlane.xlu0 %630
    %v632 = vcvt.f32.s32 %v631
    %v633 = vcvt.f32.s32 %v627
    %v634 = vshll.u32 %v633, 16
    %v635 = vadd.s32 %v634, %v632
    %v636 = vand.u32 %v451, 65535
    %v637 = vshra.s32 %v451, 16
    %v638 = vcvt.s32.f32 %v636
    %v639 = vcvt.s32.f32 %v637
    %640 = vmin.xlane.f32.xlu0 %v639
    %v641 = vpop.xlane.xlu0 %640
    %vm642 = vcmp.eq.f32.partialorder %v639, %v641
    %v643 = vsel %vm642, %v638, inf
    %644 = vmin.xlane.f32.xlu0 %v643
    %v645 = vpop.xlane.xlu0 %644
    %v646 = vcvt.f32.s32 %v645
    %v647 = vcvt.f32.s32 %v641
    %v648 = vshll.u32 %v647, 16
    %v649 = vadd.s32 %v648, %v646
    %v650 = vand.u32 %v452, 65535
    %v651 = vshra.s32 %v452, 16
    %v652 = vcvt.s32.f32 %v650
    %v653 = vcvt.s32.f32 %v651
    %654 = vmin.xlane.f32.xlu0 %v653
    %v655 = vpop.xlane.xlu0 %654
    %vm656 = vcmp.eq.f32.partialorder %v653, %v655
    %v657 = vsel %vm656, %v652, inf
    %658 = vmin.xlane.f32.xlu0 %v657
    %v659 = vpop.xlane.xlu0 %658
    %v660 = vcvt.f32.s32 %v659
    %v661 = vcvt.f32.s32 %v655
    %v662 = vshll.u32 %v661, 16
    %v663 = vadd.s32 %v662, %v660
    %v664 = vand.u32 %v453, 65535
    %v665 = vshra.s32 %v453, 16
    %v666 = vcvt.s32.f32 %v664
    %v667 = vcvt.s32.f32 %v665
    %668 = vmin.xlane.f32.xlu0 %v667
    %v669 = vpop.xlane.xlu0 %668
    %vm670 = vcmp.eq.f32.partialorder %v667, %v669
    %v671 = vsel %vm670, %v666, inf
    %672 = vmin.xlane.f32.xlu0 %v671
    %v673 = vpop.xlane.xlu0 %672
    %v674 = vcvt.f32.s32 %v673
    %v675 = vcvt.f32.s32 %v669
    %v676 = vshll.u32 %v675, 16
    %v677 = vadd.s32 %v676, %v674
    %vm678 = vcmp.eq.s32.totalorder %v89, %v467
    %vm679 = vcmp.eq.s32.totalorder %v89, %v481
    %vm680 = vcmp.eq.s32.totalorder %v89, %v495
    %vm681 = vcmp.eq.s32.totalorder %v89, %v509
    %vm682 = vcmp.eq.s32.totalorder %v89, %v523
    %vm683 = vcmp.eq.s32.totalorder %v89, %v537
    %vm684 = vcmp.eq.s32.totalorder %v89, %v551
    %vm685 = vcmp.eq.s32.totalorder %v89, %v565
    %vm686 = vcmp.eq.s32.totalorder %v89, %v579
    %vm687 = vcmp.eq.s32.totalorder %v89, %v593
    %vm688 = vcmp.eq.s32.totalorder %v89, %v607
    %vm689 = vcmp.eq.s32.totalorder %v89, %v621
    %vm690 = vcmp.eq.s32.totalorder %v89, %v635
    %vm691 = vcmp.eq.s32.totalorder %v89, %v649
    %vm692 = vcmp.eq.s32.totalorder %v89, %v663
    %vm693 = vcmp.eq.s32.totalorder %v89, %v677
    %v694 = vsel %vm678, 1, 0
    %v695 = vsel %vm679, 1, 0
    %v696 = vsel %vm680, 1, 0
    %v697 = vsel %vm681, 1, 0
    %v698 = vsel %vm682, 1, 0
    %v699 = vsel %vm683, 1, 0
    %v700 = vsel %vm684, 1, 0
    %v701 = vsel %vm685, 1, 0
    %v702 = vsel %vm686, 1, 0
    %v703 = vsel %vm687, 1, 0
    %v704 = vsel %vm688, 1, 0
    %v705 = vsel %vm689, 1, 0
    %v706 = vsel %vm690, 1, 0
    %v707 = vsel %vm691, 1, 0
    %v708 = vsel %vm692, 1, 0
    %v709 = vsel %vm693, 1, 0
    %v710 = vcvt.s32.f32 %v694
    %v711 = vcvt.s32.f32 %v695
    %v712 = vcvt.s32.f32 %v696
    %v713 = vcvt.s32.f32 %v697
    %v714 = vcvt.s32.f32 %v698
    %v715 = vcvt.s32.f32 %v699
    %v716 = vcvt.s32.f32 %v700
    %v717 = vcvt.s32.f32 %v701
    %v718 = vcvt.s32.f32 %v702
    %v719 = vcvt.s32.f32 %v703
    %v720 = vcvt.s32.f32 %v704
    %v721 = vcvt.s32.f32 %v705
    %v722 = vcvt.s32.f32 %v706
    %v723 = vcvt.s32.f32 %v707
    %v724 = vcvt.s32.f32 %v708
    %v725 = vcvt.s32.f32 %v709
    %v726 = vsel %vm158, %v710, 0.0
    %v727 = vsel %vm159, %v711, 0.0
    %v728 = vsel %vm160, %v712, 0.0
    %v729 = vsel %vm161, %v713, 0.0
    %v730 = vsel %vm162, %v714, 0.0
    %v731 = vsel %vm163, %v715, 0.0
    %v732 = vsel %vm164, %v716, 0.0
    %v733 = vsel %vm165, %v717, 0.0
    %v734 = vsel %vm166, %v718, 0.0
    %v735 = vsel %vm167, %v719, 0.0
    %v736 = vsel %vm168, %v720, 0.0
    %v737 = vsel %vm169, %v721, 0.0
    %v738 = vsel %vm170, %v722, 0.0
    %v739 = vsel %vm171, %v723, 0.0
    %v740 = vsel %vm172, %v724, 0.0
    %v741 = vsel %vm173, %v725, 0.0
    %742 = vmatprep.subr.mxu0 0.0
    %743 = vmatpush1.xpose.msra.mxu0 0.0
    %744 = vmatprep.subr.mxu0 0.0
    %745 = vmatpush1.xpose.msra.mxu0 0.0
    %746 = vmatprep.subr.mxu0 0.0
    %747 = vmatpush1.xpose.msra.mxu0 0.0
    %748 = vmatprep.subr.mxu0 0.0
    %749 = vmatpush1.xpose.msra.mxu0 0.0
    %750 = vmatprep.subr.mxu0 0.0
    %751 = vmatpush1.xpose.msra.mxu0 0.0
    %752 = vmatprep.subr.mxu0 0.0
    %753 = vmatpush1.xpose.msra.mxu0 0.0
    %754 = vmatprep.subr.mxu0 0.0
    %755 = vmatpush1.xpose.msra.mxu0 0.0
    %756 = vmatprep.subr.mxu0 0.0
    %757 = vmatpush1.xpose.msra.mxu0 0.0
    %758 = vmatprep.subr.mxu0 0.0
    %759 = vmatpush1.xpose.msra.mxu0 0.0
    %760 = vmatprep.subr.mxu0 0.0
    %761 = vmatpush1.xpose.msra.mxu0 0.0
    %762 = vmatprep.subr.mxu0 0.0
    %763 = vmatpush1.xpose.msra.mxu0 0.0
    %764 = vmatprep.subr.mxu0 0.0
    %765 = vmatpush1.xpose.msra.mxu0 0.0
    %766 = vmatprep.subr.mxu0 0.0
    %767 = vmatpush1.xpose.msra.mxu0 %v86
    %768 = vmatprep.subr.mxu0 0.0
    %769 = vmatpush1.xpose.msra.mxu0 %v85
    %770 = vmatprep.subr.mxu0 0.0
    %771 = vmatpush1.xpose.msra.mxu0 %v84
    %772 = vmatprep.subr.mxu0 0.0
    %773 = vmatpush1.xpose.msra.mxu0 %v83
    %774 = vmatprep.subr.mxu0 0.0
    %775 = vmatpush2.xpose.msra.mxu0 0.0
    %776 = vmatprep.subr.mxu0 0.0
    %777 = vmatpush2.xpose.msra.mxu0 0.0
    %778 = vmatprep.subr.mxu0 0.0
    %779 = vmatpush2.xpose.msra.mxu0 0.0
    %780 = vmatprep.subr.mxu0 0.0
    %781 = vmatpush2.xpose.msra.mxu0 0.0
    %782 = vmatprep.subr.mxu0 0.0
    %783 = vmatpush2.xpose.msra.mxu0 0.0
    %784 = vmatprep.subr.mxu0 0.0
    %785 = vmatpush2.xpose.msra.mxu0 0.0
    %786 = vmatprep.subr.mxu0 0.0
    %787 = vmatpush2.xpose.msra.mxu0 0.0
    %788 = vmatprep.subr.mxu0 0.0
    %789 = vmatpush2.xpose.msra.mxu0 0.0
    %790 = vmatprep.subr.mxu0 0.0
    %791 = vmatpush2.xpose.msra.mxu0 0.0
    %792 = vmatprep.subr.mxu0 0.0
    %793 = vmatpush2.xpose.msra.mxu0 0.0
    %794 = vmatprep.subr.mxu0 0.0
    %795 = vmatpush2.xpose.msra.mxu0 0.0
    %796 = vmatprep.subr.mxu0 0.0
    %797 = vmatpush2.xpose.msra.mxu0 0.0
    %798 = vmatprep.subr.mxu0 0.0
    %799 = vmatpush2.xpose.msra.mxu0 0.0
    %800 = vmatprep.subr.mxu0 0.0
    %801 = vmatpush2.xpose.msra.mxu0 0.0
    %802 = vmatprep.subr.mxu0 0.0
    %803 = vmatpush2.xpose.msra.mxu0 0.0
    %804 = vmatprep.subr.mxu0 0.0
    %805 = vmatpush2.xpose.msra.mxu0 0.0
    %806 = vmatprep.mubr.f32.mxu0 0.0
    %807 = vmatmul.mubr.f32.gmra.mxu0 %v726
    %v808 = vpop.f32.mrf.mxu0
    %v809 = vadd.f32 0.0, %v808
    %v810 = vpop.f32.mrf.mxu0
    %811 = vmatprep.mubr.f32.mxu0 0.0
    %812 = vmatmul.mubr.f32.gmra.mxu0 %v727
    %v813 = vpop.f32.mrf.mxu0
    %v814 = vadd.f32 0.0, %v813
    %v815 = vpop.f32.mrf.mxu0
    %816 = vmatprep.mubr.f32.mxu0 0.0
    %817 = vmatmul.mubr.f32.gmra.mxu0 %v728
    %v818 = vpop.f32.mrf.mxu0
    %v819 = vadd.f32 0.0, %v818
    %v820 = vpop.f32.mrf.mxu0
    %821 = vmatprep.mubr.f32.mxu0 0.0
    %822 = vmatmul.mubr.f32.gmra.mxu0 %v729
    %v823 = vpop.f32.mrf.mxu0
    %v824 = vadd.f32 0.0, %v823
    %v825 = vpop.f32.mrf.mxu0
    %826 = vmatprep.mubr.f32.mxu0 0.0
    %827 = vmatmul.mubr.f32.gmra.mxu0 %v730
    %v828 = vpop.f32.mrf.mxu0
    %v829 = vadd.f32 0.0, %v828
    %v830 = vpop.f32.mrf.mxu0
    %831 = vmatprep.mubr.f32.mxu0 0.0
    %832 = vmatmul.mubr.f32.gmra.mxu0 %v731
    %v833 = vpop.f32.mrf.mxu0
    %v834 = vadd.f32 0.0, %v833
    %v835 = vpop.f32.mrf.mxu0
    %836 = vmatprep.mubr.f32.mxu0 0.0
    %837 = vmatmul.mubr.f32.gmra.mxu0 %v732
    %v838 = vpop.f32.mrf.mxu0
    %v839 = vadd.f32 0.0, %v838
    %v840 = vpop.f32.mrf.mxu0
    %841 = vmatprep.mubr.f32.mxu0 0.0
    %842 = vmatmul.mubr.f32.gmra.mxu0 %v733
    %v843 = vpop.f32.mrf.mxu0
    %v844 = vadd.f32 0.0, %v843
    %v845 = vpop.f32.mrf.mxu0
    %846 = vmatprep.mubr.f32.mxu0 0.0
    %847 = vmatmul.mubr.f32.gmra.mxu0 %v734
    %v848 = vpop.f32.mrf.mxu0
    %v849 = vadd.f32 0.0, %v848
    %v850 = vpop.f32.mrf.mxu0
    %851 = vmatprep.mubr.f32.mxu0 0.0
    %852 = vmatmul.mubr.f32.gmra.mxu0 %v735
    %v853 = vpop.f32.mrf.mxu0
    %v854 = vadd.f32 0.0, %v853
    %v855 = vpop.f32.mrf.mxu0
    %856 = vmatprep.mubr.f32.mxu0 0.0
    %857 = vmatmul.mubr.f32.gmra.mxu0 %v736
    %v858 = vpop.f32.mrf.mxu0
    %v859 = vadd.f32 0.0, %v858
    %v860 = vpop.f32.mrf.mxu0
    %861 = vmatprep.mubr.f32.mxu0 0.0
    %862 = vmatmul.mubr.f32.gmra.mxu0 %v737
    %v863 = vpop.f32.mrf.mxu0
    %v864 = vadd.f32 0.0, %v863
    %v865 = vpop.f32.mrf.mxu0
    %866 = vmatprep.mubr.f32.mxu0 0.0
    %867 = vmatmul.mubr.f32.gmra.mxu0 %v738
    %v868 = vpop.f32.mrf.mxu0
    %v869 = vadd.f32 0.0, %v868
    %v870 = vpop.f32.mrf.mxu0
    %871 = vmatprep.mubr.f32.mxu0 0.0
    %872 = vmatmul.mubr.f32.gmra.mxu0 %v739
    %v873 = vpop.f32.mrf.mxu0
    %v874 = vadd.f32 0.0, %v873
    %v875 = vpop.f32.mrf.mxu0
    %876 = vmatprep.mubr.f32.mxu0 0.0
    %877 = vmatmul.mubr.f32.gmra.mxu0 %v740
    %v878 = vpop.f32.mrf.mxu0
    %v879 = vadd.f32 0.0, %v878
    %v880 = vpop.f32.mrf.mxu0
    %881 = vmatprep.mubr.f32.mxu0 0.0
    %882 = vmatmul.mubr.f32.gmra.mxu0 %v741
    %v883 = vpop.f32.mrf.mxu0
    %v884 = vadd.f32 0.0, %v883
    %v885 = vpop.f32.mrf.mxu0
    %886 = vdwg.mxu0
    %887 = vst.msk [vmem:[%s58] sm:$0xff] %vm196, %v809
    %888 = vst.msk [vmem:[%s58 + $0x8] sm:$0xff] %vm196, %v814
    %889 = vst.msk [vmem:[%s58 + $0x10] sm:$0xff] %vm196, %v819
    %890 = vst.msk [vmem:[%s58 + $0x18] sm:$0xff] %vm196, %v824
    %891 = vst.msk [vmem:[%s58 + $0x20] sm:$0xff] %vm196, %v829
    %892 = vst.msk [vmem:[%s58 + $0x28] sm:$0xff] %vm196, %v834
    %893 = vst.msk [vmem:[%s58 + $0x30] sm:$0xff] %vm196, %v839
    %894 = vst.msk [vmem:[%s58 + $0x38] sm:$0xff] %vm196, %v844
    %895 = vst.msk [vmem:[%s58 + $0x40] sm:$0xff] %vm196, %v849
    %896 = vst.msk [vmem:[%s58 + $0x48] sm:$0xff] %vm196, %v854
    %897 = vst.msk [vmem:[%s58 + $0x50] sm:$0xff] %vm196, %v859
    %898 = vst.msk [vmem:[%s58 + $0x58] sm:$0xff] %vm196, %v864
    %899 = vst.msk [vmem:[%s58 + $0x60] sm:$0xff] %vm196, %v869
    %900 = vst.msk [vmem:[%s58 + $0x68] sm:$0xff] %vm196, %v874
    %901 = vst.msk [vmem:[%s58 + $0x70] sm:$0xff] %vm196, %v879
    %902 = vst.msk [vmem:[%s58 + $0x78] sm:$0xff] %vm196, %v884
    %v903 = vcvt.s32.f32 %v89
    %v904 = vpack.c.bf16 %v903, %v903
    %v905 = vpack.c.bf16 %v727, %v726
    %v906 = vpack.c.bf16 %v729, %v728
    %v907 = vpack.c.bf16 %v731, %v730
    %v908 = vpack.c.bf16 %v733, %v732
    %v909 = vpack.c.bf16 %v735, %v734
    %v910 = vpack.c.bf16 %v737, %v736
    %v911 = vpack.c.bf16 %v739, %v738
    %v912 = vpack.c.bf16 %v741, %v740
    %913 = vmatprep.subr.bf16.mxu0 0
    %914 = vmatpush1.bf16.xpose.msra.mxu0 %v912
    %915 = vmatprep.subr.bf16.mxu0 0
    %916 = vmatpush1.bf16.xpose.msra.mxu0 %v911
    %917 = vmatprep.subr.bf16.mxu0 0
    %918 = vmatpush1.bf16.xpose.msra.mxu0 %v910
    %919 = vmatprep.subr.bf16.mxu0 0
    %920 = vmatpush1.bf16.xpose.msra.mxu0 %v909
    %921 = vmatprep.subr.bf16.mxu0 0
    %922 = vmatpush1.bf16.xpose.msra.mxu0 %v908
    %923 = vmatprep.subr.bf16.mxu0 0
    %924 = vmatpush1.bf16.xpose.msra.mxu0 %v907
    %925 = vmatprep.subr.bf16.mxu0 0
    %926 = vmatpush1.bf16.xpose.msra.mxu0 %v906
    %927 = vmatprep.subr.bf16.mxu0 0
    %928 = vmatpush1.bf16.xpose.msra.mxu0 %v905
    %929 = vmatprep.subr.bf16.mxu0 0
    %930 = vmatpush2.bf16.xpose.msra.mxu0 0
    %931 = vmatprep.subr.bf16.mxu0 0
    %932 = vmatpush2.bf16.xpose.msra.mxu0 0
    %933 = vmatprep.subr.bf16.mxu0 0
    %934 = vmatpush2.bf16.xpose.msra.mxu0 0
    %935 = vmatprep.subr.bf16.mxu0 0
    %936 = vmatpush2.bf16.xpose.msra.mxu0 0
    %937 = vmatprep.subr.bf16.mxu0 0
    %938 = vmatpush2.bf16.xpose.msra.mxu0 0
    %939 = vmatprep.subr.bf16.mxu0 0
    %940 = vmatpush2.bf16.xpose.msra.mxu0 0
    %941 = vmatprep.subr.bf16.mxu0 0
    %942 = vmatpush2.bf16.xpose.msra.mxu0 0
    %943 = vmatprep.subr.bf16.mxu0 0
    %944 = vmatpush2.bf16.xpose.msra.mxu0 0
    %945 = vmatprep.mubr.bf16.mxu0 0
    %946 = vmatmul.mubr.bf16.gmra.mxu0 %v904
    %v947 = vpop.f32.mrf.mxu0
    %v948 = vadd.f32 0.5, %v947
    %v949 = vpop.f32.mrf.mxu0
    %v950 = vpop.f32.mrf.mxu0
    %v951 = vpop.f32.mrf.mxu0
    %952 = vdwg.mxu0
    %v953 = vcvt.f32.s32.to.zero.pseudo %v948
    %954 = vst [vmem:[%s64] sm:$0x1] %v953
    %p955 = scmp.eq.s32.totalorder 0, 0
    // Predicated region
    $region14: #{_quantize_forward_impl.1} parent=1 // pred_check
      %p956 = pneg %p955
    $region15: #{_quantize_forward_impl.1} parent=1 // pred_check_branch
      %958 = sbr.rel (%p956) target = $region17
    $region16: #{_quantize_forward_impl.1} parent=1 // pred_region
      %959 = vst [vmem:[%s5] sm:$0x1] 0.0
      %960 = vst [vmem:[#allocation2] sm:$0xff] 0.0
      %961 = vst [vmem:[#allocation2 + $0x8] sm:$0xff] 0.0
      %962 = vst [vmem:[#allocation2 + $0x10] sm:$0xff] 0.0
      %963 = vst [vmem:[#allocation2 + $0x18] sm:$0xff] 0.0
      %vm964 = vcmask 0
      %965 = vst.msk [vmem:[#allocation4] sm:$0x1] %vm964, 0.0
    $region17: #{_quantize_forward_impl.1} parent=1 // pred_fallthru
      _
    %v966 = vld [vmem:[%s5] sm:$0x1]
    %v967 = vadd.f32 %v726, %v727
    %v968 = vadd.f32 %v967, %v728
    %v969 = vadd.f32 %v968, %v729
    %v970 = vadd.f32 %v969, %v730
    %v971 = vadd.f32 %v970, %v731
    %v972 = vadd.f32 %v971, %v732
    %v973 = vadd.f32 %v972, %v733
    %v974 = vadd.f32 %v973, %v734
    %v975 = vadd.f32 %v974, %v735
    %v976 = vadd.f32 %v975, %v736
    %v977 = vadd.f32 %v976, %v737
    %v978 = vadd.f32 %v977, %v738
    %v979 = vadd.f32 %v978, %v739
    %v980 = vadd.f32 %v979, %v740
    %v981 = vadd.f32 %v980, %v741
    %v982 = vrot.slane %v981, 4
    %v983 = vadd.f32 %v981, %v982
    %v984 = vrot.slane %v983, 2
    %v985 = vadd.f32 %v983, %v984
    %v986 = vrot.slane %v985, 1
    %v987 = vadd.f32 %v985, %v986
    %v988 = vadd.f32 %v966, %v987
    %989 = vst [vmem:[%s5] sm:$0x1] %v988
    %v990 = vld [vmem:[#allocation2] sm:$0xff]
    %v991 = vld [vmem:[#allocation2 + $0x8] sm:$0xff]
    %v992 = vld [vmem:[#allocation2 + $0x10] sm:$0xff]
    %v993 = vld [vmem:[#allocation2 + $0x18] sm:$0xff]
    %994 = vxpose.xlu0.b32.start [1/16] %v174, 128
    %995 = vxpose.xlu0.b32.cont [2/16] %v175, 128
    %996 = vxpose.xlu0.b32.cont [3/16] %v176, 128
    %997 = vxpose.xlu0.b32.cont [4/16] %v177, 128
    %998 = vxpose.xlu0.b32.cont [5/16] %v178, 128
    %999 = vxpose.xlu0.b32.cont [6/16] %v179, 128
    %1000 = vxpose.xlu0.b32.cont [7/16] %v180, 128
    %1001 = vxpose.xlu0.b32.cont [8/16] %v181, 128
    %1002 = vxpose.xlu0.b32.cont [9/16] %v182, 128
    %1003 = vxpose.xlu0.b32.cont [10/16] %v183, 128
    %1004 = vxpose.xlu0.b32.cont [11/16] %v184, 128
    %1005 = vxpose.xlu0.b32.cont [12/16] %v185, 128
    %1006 = vxpose.xlu0.b32.cont [13/16] %v186, 128
    %1007 = vxpose.xlu0.b32.cont [14/16] %v187, 128
    %1008 = vxpose.xlu0.b32.cont [15/16] %v188, 128
    %1009 = vxpose.xlu0.b32.end [16/16] %v189, 128
    %v1010 = vpop.trf.xlu0
    %v1011 = vpop.trf.xlu0
    %v1012 = vpop.trf.xlu0
    %v1013 = vpop.trf.xlu0
    %v1014 = vpop.trf.xlu0
    %v1015 = vpop.trf.xlu0
    %v1016 = vpop.trf.xlu0
    %v1017 = vpop.trf.xlu0
    %v1018 = vpop.trf.xlu0
    %v1019 = vpop.trf.xlu0
    %v1020 = vpop.trf.xlu0
    %v1021 = vpop.trf.xlu0
    %v1022 = vpop.trf.xlu0
    %v1023 = vpop.trf.xlu0
    %v1024 = vpop.trf.xlu0
    %v1025 = vpop.trf.xlu0
    %1026 = vmatprep.subr.mxu0 0.0
    %1027 = vmatpush1.msra.mxu0 %v741
    %1028 = vmatprep.subr.mxu0 0.0
    %1029 = vmatpush1.msra.mxu0 %v740
    %1030 = vmatprep.subr.mxu0 0.0
    %1031 = vmatpush1.msra.mxu0 %v739
    %1032 = vmatprep.subr.mxu0 0.0
    %1033 = vmatpush1.msra.mxu0 %v738
    %1034 = vmatprep.subr.mxu0 0.0
    %1035 = vmatpush1.msra.mxu0 %v737
    %1036 = vmatprep.subr.mxu0 0.0
    %1037 = vmatpush1.msra.mxu0 %v736
    %1038 = vmatprep.subr.mxu0 0.0
    %1039 = vmatpush1.msra.mxu0 %v735
    %1040 = vmatprep.subr.mxu0 0.0
    %1041 = vmatpush1.msra.mxu0 %v734
    %1042 = vmatprep.subr.mxu0 0.0
    %1043 = vmatpush1.msra.mxu0 %v733
    %1044 = vmatprep.subr.mxu0 0.0
    %1045 = vmatpush1.msra.mxu0 %v732
    %1046 = vmatprep.subr.mxu0 0.0
    %1047 = vmatpush1.msra.mxu0 %v731
    %1048 = vmatprep.subr.mxu0 0.0
    %1049 = vmatpush1.msra.mxu0 %v730
    %1050 = vmatprep.subr.mxu0 0.0
    %1051 = vmatpush1.msra.mxu0 %v729
    %1052 = vmatprep.subr.mxu0 0.0
    %1053 = vmatpush1.msra.mxu0 %v728
    %1054 = vmatprep.subr.mxu0 0.0
    %1055 = vmatpush1.msra.mxu0 %v727
    %1056 = vmatprep.subr.mxu0 0.0
    %1057 = vmatpush1.msra.mxu0 %v726
    %1058 = vmatprep.subr.mxu0 0.0
    %1059 = vmatpush2.msra.mxu0 0.0
    %1060 = vmatprep.subr.mxu0 0.0
    %1061 = vmatpush2.msra.mxu0 0.0
    %1062 = vmatprep.subr.mxu0 0.0
    %1063 = vmatpush2.msra.mxu0 0.0
    %1064 = vmatprep.subr.mxu0 0.0
    %1065 = vmatpush2.msra.mxu0 0.0
    %1066 = vmatprep.subr.mxu0 0.0
    %1067 = vmatpush2.msra.mxu0 0.0
    %1068 = vmatprep.subr.mxu0 0.0
    %1069 = vmatpush2.msra.mxu0 0.0
    %1070 = vmatprep.subr.mxu0 0.0
    %1071 = vmatpush2.msra.mxu0 0.0
    %1072 = vmatprep.subr.mxu0 0.0
    %1073 = vmatpush2.msra.mxu0 0.0
    %1074 = vmatprep.subr.mxu0 0.0
    %1075 = vmatpush2.msra.mxu0 0.0
    %1076 = vmatprep.subr.mxu0 0.0
    %1077 = vmatpush2.msra.mxu0 0.0
    %1078 = vmatprep.subr.mxu0 0.0
    %1079 = vmatpush2.msra.mxu0 0.0
    %1080 = vmatprep.subr.mxu0 0.0
    %1081 = vmatpush2.msra.mxu0 0.0
    %1082 = vmatprep.subr.mxu0 0.0
    %1083 = vmatpush2.msra.mxu0 0.0
    %1084 = vmatprep.subr.mxu0 0.0
    %1085 = vmatpush2.msra.mxu0 0.0
    %1086 = vmatprep.subr.mxu0 0.0
    %1087 = vmatpush2.msra.mxu0 0.0
    %1088 = vmatprep.subr.mxu0 0.0
    %1089 = vmatpush2.msra.mxu0 0.0
    %1090 = vmatprep.mubr.f32.mxu0 0.0
    %1091 = vmatmul.mubr.f32.gmra.mxu0 %v1010
    %v1092 = vpop.f32.mrf.mxu0
    %v1093 = vadd.f32 0.0, %v1092
    %v1094 = vpop.f32.mrf.mxu0
    %1095 = vmatprep.mubr.f32.mxu0 0.0
    %1096 = vmatmul.mubr.f32.gmra.mxu0 %v1011
    %v1097 = vpop.f32.mrf.mxu0
    %v1098 = vadd.f32 0.0, %v1097
    %v1099 = vpop.f32.mrf.mxu0
    %1100 = vmatprep.mubr.f32.mxu0 0.0
    %1101 = vmatmul.mubr.f32.gmra.mxu0 %v1012
    %v1102 = vpop.f32.mrf.mxu0
    %v1103 = vadd.f32 0.0, %v1102
    %v1104 = vpop.f32.mrf.mxu0
    %1105 = vmatprep.mubr.f32.mxu0 0.0
    %1106 = vmatmul.mubr.f32.gmra.mxu0 %v1013
    %v1107 = vpop.f32.mrf.mxu0
    %v1108 = vadd.f32 0.0, %v1107
    %v1109 = vpop.f32.mrf.mxu0
    %1110 = vdwg.mxu0
    %v1111 = vadd.f32 %v990, %v1093
    %v1112 = vadd.f32 %v991, %v1098
    %v1113 = vadd.f32 %v992, %v1103
    %v1114 = vadd.f32 %v993, %v1108
    %1115 = vst [vmem:[#allocation2] sm:$0xff] %v1111
    %1116 = vst [vmem:[#allocation2 + $0x8] sm:$0xff] %v1112
    %1117 = vst [vmem:[#allocation2 + $0x10] sm:$0xff] %v1113
    %1118 = vst [vmem:[#allocation2 + $0x18] sm:$0xff] %v1114
    %v1119 = vsub.f32 %v809, %v174
    %v1120 = vsub.f32 %v814, %v175
    %v1121 = vsub.f32 %v819, %v176
    %v1122 = vsub.f32 %v824, %v177
    %v1123 = vsub.f32 %v829, %v178
    %v1124 = vsub.f32 %v834, %v179
    %v1125 = vsub.f32 %v839, %v180
    %v1126 = vsub.f32 %v844, %v181
    %v1127 = vsub.f32 %v849, %v182
    %v1128 = vsub.f32 %v854, %v183
    %v1129 = vsub.f32 %v859, %v184
    %v1130 = vsub.f32 %v864, %v185
    %v1131 = vsub.f32 %v869, %v186
    %v1132 = vsub.f32 %v874, %v187
    %v1133 = vsub.f32 %v879, %v188
    %v1134 = vsub.f32 %v884, %v189
    %v1135 = vld [vmem:[#allocation4] sm:$0x1]
    %v1136 = vmul.f32 %v1119, %v1119
    %v1137 = vmul.f32 %v1120, %v1120
    %v1138 = vmul.f32 %v1121, %v1121
    %v1139 = vmul.f32 %v1122, %v1122
    %v1140 = vmul.f32 %v1123, %v1123
    %v1141 = vmul.f32 %v1124, %v1124
    %v1142 = vmul.f32 %v1125, %v1125
    %v1143 = vmul.f32 %v1126, %v1126
    %v1144 = vmul.f32 %v1127, %v1127
    %v1145 = vmul.f32 %v1128, %v1128
    %v1146 = vmul.f32 %v1129, %v1129
    %v1147 = vmul.f32 %v1130, %v1130
    %v1148 = vmul.f32 %v1131, %v1131
    %v1149 = vmul.f32 %v1132, %v1132
    %v1150 = vmul.f32 %v1133, %v1133
    %v1151 = vmul.f32 %v1134, %v1134
    %v1152 = vsel %vm196, %v1136, 0.0
    %v1153 = vsel %vm196, %v1137, 0.0
    %v1154 = vadd.f32 %v1152, %v1153
    %v1155 = vsel %vm196, %v1138, 0.0
    %v1156 = vadd.f32 %v1154, %v1155
    %v1157 = vsel %vm196, %v1139, 0.0
    %v1158 = vadd.f32 %v1156, %v1157
    %v1159 = vsel %vm196, %v1140, 0.0
    %v1160 = vadd.f32 %v1158, %v1159
    %v1161 = vsel %vm196, %v1141, 0.0
    %v1162 = vadd.f32 %v1160, %v1161
    %v1163 = vsel %vm196, %v1142, 0.0
    %v1164 = vadd.f32 %v1162, %v1163
    %v1165 = vsel %vm196, %v1143, 0.0
    %v1166 = vadd.f32 %v1164, %v1165
    %v1167 = vsel %vm196, %v1144, 0.0
    %v1168 = vadd.f32 %v1166, %v1167
    %v1169 = vsel %vm196, %v1145, 0.0
    %v1170 = vadd.f32 %v1168, %v1169
    %v1171 = vsel %vm196, %v1146, 0.0
    %v1172 = vadd.f32 %v1170, %v1171
    %v1173 = vsel %vm196, %v1147, 0.0
    %v1174 = vadd.f32 %v1172, %v1173
    %v1175 = vsel %vm196, %v1148, 0.0
    %v1176 = vadd.f32 %v1174, %v1175
    %v1177 = vsel %vm196, %v1149, 0.0
    %v1178 = vadd.f32 %v1176, %v1177
    %v1179 = vsel %vm196, %v1150, 0.0
    %v1180 = vadd.f32 %v1178, %v1179
    %v1181 = vsel %vm196, %v1151, 0.0
    %v1182 = vadd.f32 %v1180, %v1181
    %1183 = vadd.xlane.f32.xlu0 %v1182
    %v1184 = vpop.xlane.xlu0 %1183
    %v1185 = vrot.slane %v1184, 4
    %v1186 = vadd.f32 %v1184, %v1185
    %v1187 = vrot.slane %v1186, 2
    %v1188 = vadd.f32 %v1186, %v1187
    %v1189 = vrot.slane %v1188, 1
    %v1190 = vadd.f32 %v1188, %v1189
    %s1191 = vtos %v1190
    %v1192 = vstv %s1191
    %v1193 = vadd.f32 %v1135, %v1192
    %vm1194 = vcmask 0
    %1195 = vst.msk [vmem:[#allocation4] sm:$0x1] %vm1194, %v1193
    %s1196 = sadd.s32 0, 0
    %s1197 = smul.u32 16, %s1196
    %p1198 = scmp.lt.s32.totalorder %s1197, 15
    %s1199 = scalar_select %p1198, %s1197, 15
    %s1200 = smul.addr %s1199, 8
    %s1201 = scalar_lea.vmem %s3, %s1200
    %s1202 = sadd.s32 0, 0
    %p1203 = scmp.lt.s32.totalorder %s1202, 0
    %s1204 = scalar_select %p1203, %s1202, 0
    %s1205 = scalar_lea.vmem %s4, %s1204
    // Predicated region
    $region18: #{_quantize_forward_impl.1} parent=1 // pred_check
      _
    $region19: #{_quantize_forward_impl.1} parent=1 // pred_check_branch
      %1207 = sbr.rel (0) target = $region21
    $region20: #{_quantize_forward_impl.1} parent=1 // pred_region
      %s1208 = sadd.s32 0, 0
      %s1209 = smul.u32 16, %s1208
    $region21: #{_quantize_forward_impl.1} parent=1 // pred_fallthru
      _
    // Predicated region
    $region22: #{_quantize_forward_impl.1} parent=1 // pred_check
      _
    $region23: #{_quantize_forward_impl.1} parent=1 // pred_check_branch
      %1211 = sbr.rel (0) target = $region25
    $region24: #{_quantize_forward_impl.1} parent=1 // pred_region
      %s1212 = sadd.s32 0, 0
    $region25: #{_quantize_forward_impl.1} parent=1 // pred_fallthru
      _
    // Predicated region
    $region26: #{_quantize_forward_impl.1} parent=1 // pred_check
      _
    $region27: #{_quantize_forward_impl.1} parent=1 // pred_check_branch
      %1214 = sbr.rel (0) target = $region29
    $region28: #{_quantize_forward_impl.1} parent=1 // pred_region
      _
    $region29: #{_quantize_forward_impl.1} parent=1 // pred_fallthru
      _
    // Predicated region
    $region30: #{_quantize_forward_impl.1} parent=1 // pred_check
      _
    $region31: #{_quantize_forward_impl.1} parent=1 // pred_check_branch
      %1216 = sbr.rel (0) target = $region33
    $region32: #{_quantize_forward_impl.1} parent=1 // pred_region
      %s1218 = ssub.s32 512, 512
      %1219 = vsyncadd [#allocation3], %s1218
      %s1220 = sshll.u32 [#allocation2], 4
      %s1221 = int_to_ptr.vmem [resolvable:$true] %s1220
      %1226 = dma.vmem_to_hbm [thread:$0]  %s1221, 512, %s6, [#allocation3], 128, 128, 8
    $region33: #{_quantize_forward_impl.1} parent=1 // pred_fallthru
      _
    // Predicated region
    $region34: #{_quantize_forward_impl.1} parent=1 // pred_check
      _
    $region35: #{_quantize_forward_impl.1} parent=1 // pred_check_branch
      %1228 = sbr.rel (0) target = $region37
    $region36: #{_quantize_forward_impl.1} parent=1 // pred_region
      %s1230 = ssub.s32 16, 16
      %1231 = vsyncadd [#allocation5], %s1230
      %s1233 = sshll.u32 [#allocation4], 4
      %s1234 = int_to_ptr.vmem [resolvable:$true] %s1233
      %1236 = dma.vmem_to_hbm [thread:$0]  %s1234, 16, %s7, [#allocation5]
    $region37: #{_quantize_forward_impl.1} parent=1 // pred_fallthru
      _
    // Predicated region
    $region38: #{_quantize_forward_impl.1} parent=1 // pred_check
      _
    $region39: #{_quantize_forward_impl.1} parent=1 // pred_check_branch
      %1238 = sbr.rel (0) target = $region41
    $region40: #{_quantize_forward_impl.1} parent=1 // pred_region
      %s1239 = sadd.s32 0, 0
      %s1240 = smul.u32 16, %s1239
      %p1241 = scmp.lt.s32.totalorder %s1240, 15
      %s1242 = scalar_select %p1241, %s1240, 15
      %s1243 = smul.addr %s1242, 8
      %s1244 = scalar_lea.vmem %s3, %s1243
    $region41: #{_quantize_forward_impl.1} parent=1 // pred_fallthru
      _
    // Predicated region
    $region42: #{_quantize_forward_impl.1} parent=1 // pred_check
      _
    $region43: #{_quantize_forward_impl.1} parent=1 // pred_check_branch
      %1246 = sbr.rel (0) target = $region45
    $region44: #{_quantize_forward_impl.1} parent=1 // pred_region
      %s1247 = sadd.s32 0, 0
      %p1248 = scmp.lt.s32.totalorder %s1247, 0
      %s1249 = scalar_select %p1248, %s1247, 0
      %s1250 = scalar_lea.vmem %s4, %s1249
    $region45: #{_quantize_forward_impl.1} parent=1 // pred_fallthru
      _
    // Predicated region
    $region46: #{_quantize_forward_impl.1} parent=1 // pred_check
      _
    $region47: #{_quantize_forward_impl.1} parent=1 // pred_check_branch
      %1252 = sbr.rel (0) target = $region49
    $region48: #{_quantize_forward_impl.1} parent=1 // pred_region
      _
    $region49: #{_quantize_forward_impl.1} parent=1 // pred_fallthru
      _
    // Predicated region
    $region50: #{_quantize_forward_impl.1} parent=1 // pred_check
      _
    $region51: #{_quantize_forward_impl.1} parent=1 // pred_check_branch
      %1254 = sbr.rel (0) target = $region53
    $region52: #{_quantize_forward_impl.1} parent=1 // pred_region
      %1255 = dma.done [#allocation3], 512
    $region53: #{_quantize_forward_impl.1} parent=1 // pred_fallthru
      _
    // Predicated region
    $region54: #{_quantize_forward_impl.1} parent=1 // pred_check
      _
    $region55: #{_quantize_forward_impl.1} parent=1 // pred_check_branch
      %1257 = sbr.rel (0) target = $region57
    $region56: #{_quantize_forward_impl.1} parent=1 // pred_region
      %1258 = dma.done [#allocation5], 16
    $region57: #{_quantize_forward_impl.1} parent=1 // pred_fallthru
      _
    %1259 = vsyncpa [#allocation3], 1
    %1260 = vsyncpa [#allocation5], 1

</llo_original>
